<compile_context>
chip_gen: v6e
topology: v6e:2x2x1
jax: 0.10.0
libtpu: 0.0.40
codegen_flags: <defaults>
</compile_context>

<pallas_src>
import functools

import jax
import jax.numpy as jnp
from jax.experimental import pallas as pl
from jax.experimental.pallas import tpu as pltpu

MAX_POS = 502


def _pos_enc_kernel(x_ref, idx_ref, emb_ref, o_ref):
    # x_ref:   (TR, D)  rows of x viewed as (S*B, D)
    # idx_ref: (TR, 1)  int32 position ids for those rows
    # emb_ref: (P, D)   zero-padded embedding table (VMEM resident, constant block)
    # o_ref:   (TR, D)
    tr = x_ref.shape[0]
    p = emb_ref.shape[0]

    idx = idx_ref[...]                                           # (TR, 1) int32
    pos_iota = jax.lax.broadcasted_iota(jnp.int32, (tr, p), 1)   # (TR, P)
    one_hot = (pos_iota == idx).astype(emb_ref.dtype)            # vectorized gather mask

    # Gather == one-hot @ table on the MXU (exact: 1.0 * value + zero terms).
    # NOTE: a general row-gather (jnp.take) does not lower robustly on all TPU
    # generations; the one-hot contraction keeps the lookup vectorized instead
    # of the previous scalar per-row dynamic slices + concatenate.
    w = jnp.dot(
        one_hot,
        emb_ref[...],
        preferred_element_type=jnp.float32,
        precision=jax.lax.Precision.HIGHEST,
    )                                                            # (TR, D) f32

    # Add in f32, cast only at the store (matters if x is bf16, esp. on v5e).
    o_ref[...] = (x_ref[...].astype(jnp.float32) + w).astype(o_ref.dtype)
    # TODO(synk): training-mode dropout (p=0.1) with torch RNG parity is not
    # implemented; eval-mode dropout is the identity.


@functools.partial(jax.jit, static_argnames=("block_rows",))
def learned_position_encoding(x, pos, emb_weight, *, block_rows=512):
    """x: (S, B, D) float; pos: (B, S) int; emb_weight: (MAX_POS, D) float."""
    S, B, D = x.shape
    R = S * B

    # Lane-dense 2D view: x is row-major, so this reshape is free; row r = s*B + b.
    x2d = x.reshape(R, D)
    # Row r = s*B + b needs pos[b, s]  ->  transpose (B, S) -> (S, B), flatten.
    idx2d = jnp.transpose(pos.astype(jnp.int32), (1, 0)).reshape(R, 1)

    # Pad the table to a sublane/lane-friendly row count (502 -> 512); padded
    # rows are zero and are never selected by in-range indices.
    n_emb = emb_weight.shape[0]
    P = ((n_emb + 127) // 128) * 128
    emb_p = jnp.pad(emb_weight, ((0, P - n_emb), (0, 0)))

    # Row-tile size: multiple of 8 (sublane), capped by the problem size.
    # Partial edge blocks are fine: OOB reads are garbage rows whose writes are
    # masked off, and garbage indices select nothing in the one-hot.
    TR = min(block_rows, R)
    if TR % 8 != 0:
        TR = R if R < 8 else (TR // 8) * 8
    grid = (pl.cdiv(R, TR),)

    out2d = pl.pallas_call(
        _pos_enc_kernel,
        out_shape=jax.ShapeDtypeStruct((R, D), x.dtype),
        grid=grid,
        in_specs=[
            pl.BlockSpec((TR, D), lambda r: (r, 0)),   # x rows
            pl.BlockSpec((TR, 1), lambda r: (r, 0)),   # position ids
            pl.BlockSpec((P, D), lambda r: (0, 0)),    # full table, constant block idx
        ],
        out_specs=pl.BlockSpec((TR, D), lambda r: (r, 0)),
        compiler_params=pltpu.CompilerParams(
            # Row blocks are independent -> megacore can shard the loop on v7x.
            dimension_semantics=("parallel",),
            # Explicit budget; comfortably under v7x's 64 MiB physical VMEM.
            # (If ever VMEM-pressured, the constant-index table BlockSpec could
            # additionally be single-buffered via pipeline_mode=pl.Buffered(1).)
            vmem_limit_bytes=32 * 1024 * 1024,
        ),
    )(x2d, idx2d, emb_p)

    return out2d.reshape(S, B, D)


def _reference(x, pos, emb_weight):
    w = emb_weight[pos]                 # (B, S, D)
    w = jnp.transpose(w, (1, 0, 2))     # (S, B, D)
    return x + w                        # dropout(eval) = identity


if __name__ == "__main__":
    key = jax.random.PRNGKey(0)
    k_emb, k_x, k_pos = jax.random.split(key, 3)

    B, S, D = 2, 8, 128  # batch, seq, d_model

    # Deterministic init; row 0 zeroed to mimic nn.Embedding(padding_idx=0).
    emb_weight = 0.02 * jax.random.normal(k_emb, (MAX_POS, D), dtype=jnp.float32)
    emb_weight = emb_weight.at[0].set(0.0)

    x = jax.random.normal(k_x, (S, B, D), dtype=jnp.float32)
    pos = jax.random.randint(k_pos, (B, S), 0, MAX_POS, dtype=jnp.int32)
    pos = pos.at[0, 0].set(0)  # exercise the padding index

    out = learned_position_encoding(x, pos, emb_weight)
    out = jax.block_until_ready(out)

    ref = _reference(x, pos, emb_weight)
    assert out.shape == ref.shape and out.dtype == ref.dtype
    assert jnp.allclose(out, ref, atol=1e-5, rtol=1e-5), "mismatch vs reference"

    print("KERNEL_OK")
</pallas_src>

<mosaic_0001>
module attributes {stable_mosaic.version = 11 : i64} {
  func.func @_pos_enc_kernel(%arg0: i32, %arg1: memref<16x128xf32, #tpu.memory_space<vmem>>, %arg2: memref<16x1xi32, #tpu.memory_space<vmem>>, %arg3: memref<512x128xf32, #tpu.memory_space<vmem>>, %arg4: memref<16x128xf32, #tpu.memory_space<vmem>>) attributes {dimension_semantics = [#tpu.dimension_semantics<parallel>], iteration_bounds = array<i64: 1>, scalar_prefetch = 0 : i64, scratch_operands = 0 : i64, tpu.core_type = #tpu.core_type<tc>, window_params = [{transform_indices = @transform_0, window_bounds = array<i64: 16, 128>}, {transform_indices = @transform_1, window_bounds = array<i64: 16, 1>}, {pipeline_mode = #tpu.pipeline_mode<synchronous>, transform_indices = @transform_2, window_bounds = array<i64: 512, 128>}, {transform_indices = @transform_3, window_bounds = array<i64: 16, 128>}]} {
    %c0 = arith.constant 0 : index
    %c0_0 = arith.constant 0 : index
    %0 = vector.load %arg2[%c0, %c0_0] : memref<16x1xi32, #tpu.memory_space<vmem>>, vector<16x1xi32>
    %1 = tpu.iota {dimensions = array<i32: 1>} : vector<16x512xi32>
    %2 = vector.broadcast %0 : vector<16x1xi32> to vector<16x512xi32>
    %3 = arith.cmpi eq, %1, %2 : vector<16x512xi32>
    %4 = arith.extui %3 : vector<16x512xi1> to vector<16x512xi32>
    %5 = arith.sitofp %4 : vector<16x512xi32> to vector<16x512xf32>
    %c0_1 = arith.constant 0 : index
    %c0_2 = arith.constant 0 : index
    %6 = vector.load %arg3[%c0_1, %c0_2] : memref<512x128xf32, #tpu.memory_space<vmem>>, vector<512x128xf32>
    %cst = arith.constant dense<0.000000e+00> : vector<16x128xf32>
    %7 = tpu.matmul %5, %6, %cst {dimension_numbers = #tpu.dot_dimension_numbers<[1], [0], [0], [1], [0, 0, 1, 1], [], []>, precision = #tpu.contract_precision<fp32>} : vector<16x512xf32>, vector<512x128xf32>, vector<16x128xf32> -> vector<16x128xf32>
    %c0_3 = arith.constant 0 : index
    %c0_4 = arith.constant 0 : index
    %8 = vector.load %arg1[%c0_3, %c0_4] : memref<16x128xf32, #tpu.memory_space<vmem>>, vector<16x128xf32>
    %9 = arith.addf %8, %7 : vector<16x128xf32>
    %c0_5 = arith.constant 0 : index
    %c0_6 = arith.constant 0 : index
    %10 = vector.load %arg4[%c0_5, %c0_6] : memref<16x128xf32, #tpu.memory_space<vmem>>, vector<16x128xf32>
    tpu.vector_store %arg4[%c0_5, %c0_6], %9 {strides = array<i32>} : memref<16x128xf32, #tpu.memory_space<vmem>>, vector<16x128xf32>,
    return
  }
  func.func @transform_0(%arg0: i32) -> (i32, i32) {
    %c0_i32 = arith.constant 0 : i32
    %c0_i32_0 = arith.constant 0 : i32
    return %arg0, %c0_i32 : i32, i32
  }
  func.func @transform_1(%arg0: i32) -> (i32, i32) {
    %c0_i32 = arith.constant 0 : i32
    %c0_i32_0 = arith.constant 0 : i32
    return %arg0, %c0_i32 : i32, i32
  }
  func.func @transform_2(%arg0: i32) -> (i32, i32) {
    %c0_i32 = arith.constant 0 : i32
    %c0_i32_0 = arith.constant 0 : i32
    %c0_i32_1 = arith.constant 0 : i32
    return %c0_i32, %c0_i32_0 : i32, i32
  }
  func.func @transform_3(%arg0: i32) -> (i32, i32) {
    %c0_i32 = arith.constant 0 : i32
    %c0_i32_0 = arith.constant 0 : i32
    return %arg0, %c0_i32 : i32, i32
  }
}

</mosaic_0001>

<llo_original>
// kernel: learned_position_encoding.1
$region0: #{learned_position_encoding.1}
  #allocation0 [shape = 'u32[]', space=smem, size = 0x4, offset = 0x4, fixed_abs, tag = 'smem constant byte address 0x4 - core index']
  #allocation1 [shape = 'u32[144,128]{1,0:T(1,128)}', space=vmem, size = 0x12000, scoped, tag = 'internal scratch']
  %s0 = inlined_call_operand.vmem [shape: f32[16,128], index: 0, kind: input, shape index: {}]
  %s1 = inlined_call_operand.vmem [shape: s32[16,1], index: 1, kind: input, shape index: {}]
  %s2 = inlined_call_operand.vmem [shape: f32[512,128], index: 2, kind: input, shape index: {}]
  %s3 = inlined_call_operand.hbm [shape: f32[16,128], index: 3, kind: output, shape index: {}]
  %s4 = sld [smem:[#allocation0]]
  $region22: #{learned_position_encoding.1} parent=0
    _
  %s6 = ssub.s32 1, %s4
  %s7 = scalar_select 0, %s6, %s4
  $region1: #{learned_position_encoding.1} parent=0
    #allocation2 [shape = 'u8[8192]{0}', space=vmem, size = 0x2000, scoped, tag = 'output window, operand 0, single buffered']
    #allocation3 [shape = 's32[1]{0}', space=sflag, size = 0x4, scoped, tag = 'scoped memory for learned_position_encoding.1']
    %8 = vsyncpa [#allocation3], 0
    // Predicated region
    $region2: #{learned_position_encoding.1} parent=1 // pred_check
      _
    $region3: #{learned_position_encoding.1} parent=1 // pred_check_branch
      %10 = sbr.rel (0) target = $region5
    $region4: #{learned_position_encoding.1} parent=1 // pred_region
      _
    $region5: #{learned_position_encoding.1} parent=1 // pred_fallthru
      _
    // Predicated region
    $region6: #{learned_position_encoding.1} parent=1 // pred_check
      _
    $region7: #{learned_position_encoding.1} parent=1 // pred_check_branch
      %12 = sbr.rel (0) target = $region9
    $region8: #{learned_position_encoding.1} parent=1 // pred_region
      _
    $region9: #{learned_position_encoding.1} parent=1 // pred_fallthru
      _
    // Predicated region
    $region10: #{learned_position_encoding.1} parent=1 // pred_check
      _
    $region11: #{learned_position_encoding.1} parent=1 // pred_check_branch
      %14 = sbr.rel (0) target = $region13
    $region12: #{learned_position_encoding.1} parent=1 // pred_region
      _
    $region13: #{learned_position_encoding.1} parent=1 // pred_fallthru
      _
    %v15 = vld [vmem:[%s1] sm:$0xff]
    %v16 = vld [vmem:[%s1 + $0x8] sm:$0xff]
    %v17 = vlaneseq
    %v18 = vand.u32 %v17, 127
    %v19 = vadd.s32 %v18, 128
    %v20 = vadd.s32 %v18, 256
    %v21 = vadd.s32 %v18, 384
    %22 = vset.pattern.permute.xlu0 0
    %23 = vperm.xlu0 %22, %v15
    %v24 = vpop.permute.xlu0 %23
    %25 = vset.pattern.permute.xlu0 0
    %26 = vperm.xlu0 %25, %v16
    %v27 = vpop.permute.xlu0 %26
    %vm28 = vcmp.eq.s32.totalorder %v18, %v24
    %vm29 = vcmp.eq.s32.totalorder %v19, %v24
    %vm30 = vcmp.eq.s32.totalorder %v20, %v24
    %vm31 = vcmp.eq.s32.totalorder %v21, %v24
    %vm32 = vcmp.eq.s32.totalorder %v18, %v27
    %vm33 = vcmp.eq.s32.totalorder %v19, %v27
    %vm34 = vcmp.eq.s32.totalorder %v20, %v27
    %vm35 = vcmp.eq.s32.totalorder %v21, %v27
    %v36 = vsel %vm28, 1, 0
    %v37 = vsel %vm29, 1, 0
    %v38 = vsel %vm30, 1, 0
    %v39 = vsel %vm31, 1, 0
    %v40 = vsel %vm32, 1, 0
    %v41 = vsel %vm33, 1, 0
    %v42 = vsel %vm34, 1, 0
    %v43 = vsel %vm35, 1, 0
    %v44 = vcvt.s32.f32 %v36
    %v45 = vcvt.s32.f32 %v37
    %v46 = vcvt.s32.f32 %v38
    %v47 = vcvt.s32.f32 %v39
    %v48 = vcvt.s32.f32 %v40
    %v49 = vcvt.s32.f32 %v41
    %v50 = vcvt.s32.f32 %v42
    %v51 = vcvt.s32.f32 %v43
    %v52 = vld [vmem:[%s2] sm:$0xff]
    %v53 = vld [vmem:[%s2 + $0x8] sm:$0xff]
    %v54 = vld [vmem:[%s2 + $0x10] sm:$0xff]
    %v55 = vld [vmem:[%s2 + $0x18] sm:$0xff]
    %v56 = vld [vmem:[%s2 + $0x20] sm:$0xff]
    %v57 = vld [vmem:[%s2 + $0x28] sm:$0xff]
    %v58 = vld [vmem:[%s2 + $0x30] sm:$0xff]
    %v59 = vld [vmem:[%s2 + $0x38] sm:$0xff]
    %v60 = vld [vmem:[%s2 + $0x40] sm:$0xff]
    %v61 = vld [vmem:[%s2 + $0x48] sm:$0xff]
    %v62 = vld [vmem:[%s2 + $0x50] sm:$0xff]
    %v63 = vld [vmem:[%s2 + $0x58] sm:$0xff]
    %v64 = vld [vmem:[%s2 + $0x60] sm:$0xff]
    %v65 = vld [vmem:[%s2 + $0x68] sm:$0xff]
    %v66 = vld [vmem:[%s2 + $0x70] sm:$0xff]
    %v67 = vld [vmem:[%s2 + $0x78] sm:$0xff]
    %v68 = vld [vmem:[%s2 + $0x80] sm:$0xff]
    %v69 = vld [vmem:[%s2 + $0x88] sm:$0xff]
    %v70 = vld [vmem:[%s2 + $0x90] sm:$0xff]
    %v71 = vld [vmem:[%s2 + $0x98] sm:$0xff]
    %v72 = vld [vmem:[%s2 + $0xa0] sm:$0xff]
    %v73 = vld [vmem:[%s2 + $0xa8] sm:$0xff]
    %v74 = vld [vmem:[%s2 + $0xb0] sm:$0xff]
    %v75 = vld [vmem:[%s2 + $0xb8] sm:$0xff]
    %v76 = vld [vmem:[%s2 + $0xc0] sm:$0xff]
    %v77 = vld [vmem:[%s2 + $0xc8] sm:$0xff]
    %v78 = vld [vmem:[%s2 + $0xd0] sm:$0xff]
    %v79 = vld [vmem:[%s2 + $0xd8] sm:$0xff]
    %v80 = vld [vmem:[%s2 + $0xe0] sm:$0xff]
    %v81 = vld [vmem:[%s2 + $0xe8] sm:$0xff]
    %v82 = vld [vmem:[%s2 + $0xf0] sm:$0xff]
    %v83 = vld [vmem:[%s2 + $0xf8] sm:$0xff]
    %v84 = vld [vmem:[%s2 + $0x100] sm:$0xff]
    %v85 = vld [vmem:[%s2 + $0x108] sm:$0xff]
    %v86 = vld [vmem:[%s2 + $0x110] sm:$0xff]
    %v87 = vld [vmem:[%s2 + $0x118] sm:$0xff]
    %v88 = vld [vmem:[%s2 + $0x120] sm:$0xff]
    %v89 = vld [vmem:[%s2 + $0x128] sm:$0xff]
    %v90 = vld [vmem:[%s2 + $0x130] sm:$0xff]
    %v91 = vld [vmem:[%s2 + $0x138] sm:$0xff]
    %v92 = vld [vmem:[%s2 + $0x140] sm:$0xff]
    %v93 = vld [vmem:[%s2 + $0x148] sm:$0xff]
    %v94 = vld [vmem:[%s2 + $0x150] sm:$0xff]
    %v95 = vld [vmem:[%s2 + $0x158] sm:$0xff]
    %v96 = vld [vmem:[%s2 + $0x160] sm:$0xff]
    %v97 = vld [vmem:[%s2 + $0x168] sm:$0xff]
    %v98 = vld [vmem:[%s2 + $0x170] sm:$0xff]
    %v99 = vld [vmem:[%s2 + $0x178] sm:$0xff]
    %v100 = vld [vmem:[%s2 + $0x180] sm:$0xff]
    %v101 = vld [vmem:[%s2 + $0x188] sm:$0xff]
    %v102 = vld [vmem:[%s2 + $0x190] sm:$0xff]
    %v103 = vld [vmem:[%s2 + $0x198] sm:$0xff]
    %v104 = vld [vmem:[%s2 + $0x1a0] sm:$0xff]
    %v105 = vld [vmem:[%s2 + $0x1a8] sm:$0xff]
    %v106 = vld [vmem:[%s2 + $0x1b0] sm:$0xff]
    %v107 = vld [vmem:[%s2 + $0x1b8] sm:$0xff]
    %v108 = vld [vmem:[%s2 + $0x1c0] sm:$0xff]
    %v109 = vld [vmem:[%s2 + $0x1c8] sm:$0xff]
    %v110 = vld [vmem:[%s2 + $0x1d0] sm:$0xff]
    %v111 = vld [vmem:[%s2 + $0x1d8] sm:$0xff]
    %v112 = vld [vmem:[%s2 + $0x1e0] sm:$0xff]
    %v113 = vld [vmem:[%s2 + $0x1e8] sm:$0xff]
    %v114 = vld [vmem:[%s2 + $0x1f0] sm:$0xff]
    %v115 = vld [vmem:[%s2 + $0x1f8] sm:$0xff]
    %116 = vmatprep.subr.mxu0 0.0
    %v117 = vand.u32 %v67, 4294901760
    %118 = vmatpush1.msra.mxu0 %v117
    %119 = vmatprep.subr.mxu0 0.0
    %v120 = vand.u32 %v66, 4294901760
    %121 = vmatpush1.msra.mxu0 %v120
    %122 = vmatprep.subr.mxu0 0.0
    %v123 = vand.u32 %v65, 4294901760
    %124 = vmatpush1.msra.mxu0 %v123
    %125 = vmatprep.subr.mxu0 0.0
    %v126 = vand.u32 %v64, 4294901760
    %127 = vmatpush1.msra.mxu0 %v126
    %128 = vmatprep.subr.mxu0 0.0
    %v129 = vand.u32 %v63, 4294901760
    %130 = vmatpush1.msra.mxu0 %v129
    %131 = vmatprep.subr.mxu0 0.0
    %v132 = vand.u32 %v62, 4294901760
    %133 = vmatpush1.msra.mxu0 %v132
    %134 = vmatprep.subr.mxu0 0.0
    %v135 = vand.u32 %v61, 4294901760
    %136 = vmatpush1.msra.mxu0 %v135
    %137 = vmatprep.subr.mxu0 0.0
    %v138 = vand.u32 %v60, 4294901760
    %139 = vmatpush1.msra.mxu0 %v138
    %140 = vmatprep.subr.mxu0 0.0
    %v141 = vand.u32 %v59, 4294901760
    %142 = vmatpush1.msra.mxu0 %v141
    %143 = vmatprep.subr.mxu0 0.0
    %v144 = vand.u32 %v58, 4294901760
    %145 = vmatpush1.msra.mxu0 %v144
    %146 = vmatprep.subr.mxu0 0.0
    %v147 = vand.u32 %v57, 4294901760
    %148 = vmatpush1.msra.mxu0 %v147
    %149 = vmatprep.subr.mxu0 0.0
    %v150 = vand.u32 %v56, 4294901760
    %151 = vmatpush1.msra.mxu0 %v150
    %152 = vmatprep.subr.mxu0 0.0
    %v153 = vand.u32 %v55, 4294901760
    %154 = vmatpush1.msra.mxu0 %v153
    %155 = vmatprep.subr.mxu0 0.0
    %v156 = vand.u32 %v54, 4294901760
    %157 = vmatpush1.msra.mxu0 %v156
    %158 = vmatprep.subr.mxu0 0.0
    %v159 = vand.u32 %v53, 4294901760
    %160 = vmatpush1.msra.mxu0 %v159
    %161 = vmatprep.subr.mxu0 0.0
    %v162 = vand.u32 %v52, 4294901760
    %163 = vmatpush1.msra.mxu0 %v162
    %164 = vmatprep.subr.mxu0 0.0
    %v165 = vand.u32 %v83, 4294901760
    %166 = vmatpush2.msra.mxu0 %v165
    %167 = vmatprep.subr.mxu0 0.0
    %v168 = vand.u32 %v82, 4294901760
    %169 = vmatpush2.msra.mxu0 %v168
    %170 = vmatprep.subr.mxu0 0.0
    %v171 = vand.u32 %v81, 4294901760
    %172 = vmatpush2.msra.mxu0 %v171
    %173 = vmatprep.subr.mxu0 0.0
    %v174 = vand.u32 %v80, 4294901760
    %175 = vmatpush2.msra.mxu0 %v174
    %176 = vmatprep.subr.mxu0 0.0
    %v177 = vand.u32 %v79, 4294901760
    %178 = vmatpush2.msra.mxu0 %v177
    %179 = vmatprep.subr.mxu0 0.0
    %v180 = vand.u32 %v78, 4294901760
    %181 = vmatpush2.msra.mxu0 %v180
    %182 = vmatprep.subr.mxu0 0.0
    %v183 = vand.u32 %v77, 4294901760
    %184 = vmatpush2.msra.mxu0 %v183
    %185 = vmatprep.subr.mxu0 0.0
    %v186 = vand.u32 %v76, 4294901760
    %187 = vmatpush2.msra.mxu0 %v186
    %188 = vmatprep.subr.mxu0 0.0
    %v189 = vand.u32 %v75, 4294901760
    %190 = vmatpush2.msra.mxu0 %v189
    %191 = vmatprep.subr.mxu0 0.0
    %v192 = vand.u32 %v74, 4294901760
    %193 = vmatpush2.msra.mxu0 %v192
    %194 = vmatprep.subr.mxu0 0.0
    %v195 = vand.u32 %v73, 4294901760
    %196 = vmatpush2.msra.mxu0 %v195
    %197 = vmatprep.subr.mxu0 0.0
    %v198 = vand.u32 %v72, 4294901760
    %199 = vmatpush2.msra.mxu0 %v198
    %200 = vmatprep.subr.mxu0 0.0
    %v201 = vand.u32 %v71, 4294901760
    %202 = vmatpush2.msra.mxu0 %v201
    %203 = vmatprep.subr.mxu0 0.0
    %v204 = vand.u32 %v70, 4294901760
    %205 = vmatpush2.msra.mxu0 %v204
    %206 = vmatprep.subr.mxu0 0.0
    %v207 = vand.u32 %v69, 4294901760
    %208 = vmatpush2.msra.mxu0 %v207
    %209 = vmatprep.subr.mxu0 0.0
    %v210 = vand.u32 %v68, 4294901760
    %211 = vmatpush2.msra.mxu0 %v210
    %v212 = vand.u32 %v45, 4294901760
    %v213 = vsub.f32 %v45, %v212
    %v214 = vand.u32 %v213, 4294901760
    %v215 = vsub.f32 %v213, %v214
    %v216 = vand.u32 %v215, 4294901760
    %217 = vmatprep.mubr.f32.mxu0 %v216
    %v218 = vand.u32 %v44, 4294901760
    %v219 = vsub.f32 %v44, %v218
    %v220 = vand.u32 %v219, 4294901760
    %v221 = vsub.f32 %v219, %v220
    %v222 = vand.u32 %v221, 4294901760
    %223 = vmatmul.mubr.f32.gmra.mxu0 %v222
    %v224 = vpop.f32.mrf.mxu0
    %v225 = vadd.f32 0.0, %v224
    %v226 = vpop.f32.mrf.mxu0
    %v227 = vand.u32 %v49, 4294901760
    %v228 = vsub.f32 %v49, %v227
    %v229 = vand.u32 %v228, 4294901760
    %v230 = vsub.f32 %v228, %v229
    %v231 = vand.u32 %v230, 4294901760
    %232 = vmatprep.mubr.f32.mxu0 %v231
    %v233 = vand.u32 %v48, 4294901760
    %v234 = vsub.f32 %v48, %v233
    %v235 = vand.u32 %v234, 4294901760
    %v236 = vsub.f32 %v234, %v235
    %v237 = vand.u32 %v236, 4294901760
    %238 = vmatmul.mubr.f32.gmra.mxu0 %v237
    %v239 = vpop.f32.mrf.mxu0
    %v240 = vadd.f32 0.0, %v239
    %v241 = vpop.f32.mrf.mxu0
    %242 = vdwg.mxu0
    %243 = vmatprep.subr.mxu0 0.0
    %v244 = vand.u32 %v67, 4294901760
    %v245 = vsub.f32 %v67, %v244
    %v246 = vand.u32 %v245, 4294901760
    %v247 = vsub.f32 %v245, %v246
    %v248 = vand.u32 %v247, 4294901760
    %249 = vmatpush1.msra.mxu0 %v248
    %250 = vmatprep.subr.mxu0 0.0
    %v251 = vand.u32 %v66, 4294901760
    %v252 = vsub.f32 %v66, %v251
    %v253 = vand.u32 %v252, 4294901760
    %v254 = vsub.f32 %v252, %v253
    %v255 = vand.u32 %v254, 4294901760
    %256 = vmatpush1.msra.mxu0 %v255
    %257 = vmatprep.subr.mxu0 0.0
    %v258 = vand.u32 %v65, 4294901760
    %v259 = vsub.f32 %v65, %v258
    %v260 = vand.u32 %v259, 4294901760
    %v261 = vsub.f32 %v259, %v260
    %v262 = vand.u32 %v261, 4294901760
    %263 = vmatpush1.msra.mxu0 %v262
    %264 = vmatprep.subr.mxu0 0.0
    %v265 = vand.u32 %v64, 4294901760
    %v266 = vsub.f32 %v64, %v265
    %v267 = vand.u32 %v266, 4294901760
    %v268 = vsub.f32 %v266, %v267
    %v269 = vand.u32 %v268, 4294901760
    %270 = vmatpush1.msra.mxu0 %v269
    %271 = vmatprep.subr.mxu0 0.0
    %v272 = vand.u32 %v63, 4294901760
    %v273 = vsub.f32 %v63, %v272
    %v274 = vand.u32 %v273, 4294901760
    %v275 = vsub.f32 %v273, %v274
    %v276 = vand.u32 %v275, 4294901760
    %277 = vmatpush1.msra.mxu0 %v276
    %278 = vmatprep.subr.mxu0 0.0
    %v279 = vand.u32 %v62, 4294901760
    %v280 = vsub.f32 %v62, %v279
    %v281 = vand.u32 %v280, 4294901760
    %v282 = vsub.f32 %v280, %v281
    %v283 = vand.u32 %v282, 4294901760
    %284 = vmatpush1.msra.mxu0 %v283
    %285 = vmatprep.subr.mxu0 0.0
    %v286 = vand.u32 %v61, 4294901760
    %v287 = vsub.f32 %v61, %v286
    %v288 = vand.u32 %v287, 4294901760
    %v289 = vsub.f32 %v287, %v288
    %v290 = vand.u32 %v289, 4294901760
    %291 = vmatpush1.msra.mxu0 %v290
    %292 = vmatprep.subr.mxu0 0.0
    %v293 = vand.u32 %v60, 4294901760
    %v294 = vsub.f32 %v60, %v293
    %v295 = vand.u32 %v294, 4294901760
    %v296 = vsub.f32 %v294, %v295
    %v297 = vand.u32 %v296, 4294901760
    %298 = vmatpush1.msra.mxu0 %v297
    %299 = vmatprep.subr.mxu0 0.0
    %v300 = vand.u32 %v59, 4294901760
    %v301 = vsub.f32 %v59, %v300
    %v302 = vand.u32 %v301, 4294901760
    %v303 = vsub.f32 %v301, %v302
    %v304 = vand.u32 %v303, 4294901760
    %305 = vmatpush1.msra.mxu0 %v304
    %306 = vmatprep.subr.mxu0 0.0
    %v307 = vand.u32 %v58, 4294901760
    %v308 = vsub.f32 %v58, %v307
    %v309 = vand.u32 %v308, 4294901760
    %v310 = vsub.f32 %v308, %v309
    %v311 = vand.u32 %v310, 4294901760
    %312 = vmatpush1.msra.mxu0 %v311
    %313 = vmatprep.subr.mxu0 0.0
    %v314 = vand.u32 %v57, 4294901760
    %v315 = vsub.f32 %v57, %v314
    %v316 = vand.u32 %v315, 4294901760
    %v317 = vsub.f32 %v315, %v316
    %v318 = vand.u32 %v317, 4294901760
    %319 = vmatpush1.msra.mxu0 %v318
    %320 = vmatprep.subr.mxu0 0.0
    %v321 = vand.u32 %v56, 4294901760
    %v322 = vsub.f32 %v56, %v321
    %v323 = vand.u32 %v322, 4294901760
    %v324 = vsub.f32 %v322, %v323
    %v325 = vand.u32 %v324, 4294901760
    %326 = vmatpush1.msra.mxu0 %v325
    %327 = vmatprep.subr.mxu0 0.0
    %v328 = vand.u32 %v55, 4294901760
    %v329 = vsub.f32 %v55, %v328
    %v330 = vand.u32 %v329, 4294901760
    %v331 = vsub.f32 %v329, %v330
    %v332 = vand.u32 %v331, 4294901760
    %333 = vmatpush1.msra.mxu0 %v332
    %334 = vmatprep.subr.mxu0 0.0
    %v335 = vand.u32 %v54, 4294901760
    %v336 = vsub.f32 %v54, %v335
    %v337 = vand.u32 %v336, 4294901760
    %v338 = vsub.f32 %v336, %v337
    %v339 = vand.u32 %v338, 4294901760
    %340 = vmatpush1.msra.mxu0 %v339
    %341 = vmatprep.subr.mxu0 0.0
    %v342 = vand.u32 %v53, 4294901760
    %v343 = vsub.f32 %v53, %v342
    %v344 = vand.u32 %v343, 4294901760
    %v345 = vsub.f32 %v343, %v344
    %v346 = vand.u32 %v345, 4294901760
    %347 = vmatpush1.msra.mxu0 %v346
    %348 = vmatprep.subr.mxu0 0.0
    %v349 = vand.u32 %v52, 4294901760
    %v350 = vsub.f32 %v52, %v349
    %v351 = vand.u32 %v350, 4294901760
    %v352 = vsub.f32 %v350, %v351
    %v353 = vand.u32 %v352, 4294901760
    %354 = vmatpush1.msra.mxu0 %v353
    %355 = vmatprep.subr.mxu0 0.0
    %v356 = vand.u32 %v83, 4294901760
    %v357 = vsub.f32 %v83, %v356
    %v358 = vand.u32 %v357, 4294901760
    %v359 = vsub.f32 %v357, %v358
    %v360 = vand.u32 %v359, 4294901760
    %361 = vmatpush2.msra.mxu0 %v360
    %362 = vmatprep.subr.mxu0 0.0
    %v363 = vand.u32 %v82, 4294901760
    %v364 = vsub.f32 %v82, %v363
    %v365 = vand.u32 %v364, 4294901760
    %v366 = vsub.f32 %v364, %v365
    %v367 = vand.u32 %v366, 4294901760
    %368 = vmatpush2.msra.mxu0 %v367
    %369 = vmatprep.subr.mxu0 0.0
    %v370 = vand.u32 %v81, 4294901760
    %v371 = vsub.f32 %v81, %v370
    %v372 = vand.u32 %v371, 4294901760
    %v373 = vsub.f32 %v371, %v372
    %v374 = vand.u32 %v373, 4294901760
    %375 = vmatpush2.msra.mxu0 %v374
    %376 = vmatprep.subr.mxu0 0.0
    %v377 = vand.u32 %v80, 4294901760
    %v378 = vsub.f32 %v80, %v377
    %v379 = vand.u32 %v378, 4294901760
    %v380 = vsub.f32 %v378, %v379
    %v381 = vand.u32 %v380, 4294901760
    %382 = vmatpush2.msra.mxu0 %v381
    %383 = vmatprep.subr.mxu0 0.0
    %v384 = vand.u32 %v79, 4294901760
    %v385 = vsub.f32 %v79, %v384
    %v386 = vand.u32 %v385, 4294901760
    %v387 = vsub.f32 %v385, %v386
    %v388 = vand.u32 %v387, 4294901760
    %389 = vmatpush2.msra.mxu0 %v388
    %390 = vmatprep.subr.mxu0 0.0
    %v391 = vand.u32 %v78, 4294901760
    %v392 = vsub.f32 %v78, %v391
    %v393 = vand.u32 %v392, 4294901760
    %v394 = vsub.f32 %v392, %v393
    %v395 = vand.u32 %v394, 4294901760
    %396 = vmatpush2.msra.mxu0 %v395
    %397 = vmatprep.subr.mxu0 0.0
    %v398 = vand.u32 %v77, 4294901760
    %v399 = vsub.f32 %v77, %v398
    %v400 = vand.u32 %v399, 4294901760
    %v401 = vsub.f32 %v399, %v400
    %v402 = vand.u32 %v401, 4294901760
    %403 = vmatpush2.msra.mxu0 %v402
    %404 = vmatprep.subr.mxu0 0.0
    %v405 = vand.u32 %v76, 4294901760
    %v406 = vsub.f32 %v76, %v405
    %v407 = vand.u32 %v406, 4294901760
    %v408 = vsub.f32 %v406, %v407
    %v409 = vand.u32 %v408, 4294901760
    %410 = vmatpush2.msra.mxu0 %v409
    %411 = vmatprep.subr.mxu0 0.0
    %v412 = vand.u32 %v75, 4294901760
    %v413 = vsub.f32 %v75, %v412
    %v414 = vand.u32 %v413, 4294901760
    %v415 = vsub.f32 %v413, %v414
    %v416 = vand.u32 %v415, 4294901760
    %417 = vmatpush2.msra.mxu0 %v416
    %418 = vmatprep.subr.mxu0 0.0
    %v419 = vand.u32 %v74, 4294901760
    %v420 = vsub.f32 %v74, %v419
    %v421 = vand.u32 %v420, 4294901760
    %v422 = vsub.f32 %v420, %v421
    %v423 = vand.u32 %v422, 4294901760
    %424 = vmatpush2.msra.mxu0 %v423
    %425 = vmatprep.subr.mxu0 0.0
    %v426 = vand.u32 %v73, 4294901760
    %v427 = vsub.f32 %v73, %v426
    %v428 = vand.u32 %v427, 4294901760
    %v429 = vsub.f32 %v427, %v428
    %v430 = vand.u32 %v429, 4294901760
    %431 = vmatpush2.msra.mxu0 %v430
    %432 = vmatprep.subr.mxu0 0.0
    %v433 = vand.u32 %v72, 4294901760
    %v434 = vsub.f32 %v72, %v433
    %v435 = vand.u32 %v434, 4294901760
    %v436 = vsub.f32 %v434, %v435
    %v437 = vand.u32 %v436, 4294901760
    %438 = vmatpush2.msra.mxu0 %v437
    %439 = vmatprep.subr.mxu0 0.0
    %v440 = vand.u32 %v71, 4294901760
    %v441 = vsub.f32 %v71, %v440
    %v442 = vand.u32 %v441, 4294901760
    %v443 = vsub.f32 %v441, %v442
    %v444 = vand.u32 %v443, 4294901760
    %445 = vmatpush2.msra.mxu0 %v444
    %446 = vmatprep.subr.mxu0 0.0
    %v447 = vand.u32 %v70, 4294901760
    %v448 = vsub.f32 %v70, %v447
    %v449 = vand.u32 %v448, 4294901760
    %v450 = vsub.f32 %v448, %v449
    %v451 = vand.u32 %v450, 4294901760
    %452 = vmatpush2.msra.mxu0 %v451
    %453 = vmatprep.subr.mxu0 0.0
    %v454 = vand.u32 %v69, 4294901760
    %v455 = vsub.f32 %v69, %v454
    %v456 = vand.u32 %v455, 4294901760
    %v457 = vsub.f32 %v455, %v456
    %v458 = vand.u32 %v457, 4294901760
    %459 = vmatpush2.msra.mxu0 %v458
    %460 = vmatprep.subr.mxu0 0.0
    %v461 = vand.u32 %v68, 4294901760
    %v462 = vsub.f32 %v68, %v461
    %v463 = vand.u32 %v462, 4294901760
    %v464 = vsub.f32 %v462, %v463
    %v465 = vand.u32 %v464, 4294901760
    %466 = vmatpush2.msra.mxu0 %v465
    %v467 = vand.u32 %v45, 4294901760
    %468 = vmatprep.mubr.f32.mxu0 %v467
    %v469 = vand.u32 %v44, 4294901760
    %470 = vmatmul.mubr.f32.gmra.mxu0 %v469
    %v471 = vpop.f32.mrf.mxu0
    %v472 = vadd.f32 %v225, %v471
    %v473 = vpop.f32.mrf.mxu0
    %v474 = vand.u32 %v49, 4294901760
    %475 = vmatprep.mubr.f32.mxu0 %v474
    %v476 = vand.u32 %v48, 4294901760
    %477 = vmatmul.mubr.f32.gmra.mxu0 %v476
    %v478 = vpop.f32.mrf.mxu0
    %v479 = vadd.f32 %v240, %v478
    %v480 = vpop.f32.mrf.mxu0
    %481 = vdwg.mxu0
    %482 = vmatprep.subr.mxu0 0.0
    %v483 = vand.u32 %v67, 4294901760
    %v484 = vsub.f32 %v67, %v483
    %485 = vmatpush1.msra.mxu0 %v484
    %486 = vmatprep.subr.mxu0 0.0
    %v487 = vand.u32 %v66, 4294901760
    %v488 = vsub.f32 %v66, %v487
    %489 = vmatpush1.msra.mxu0 %v488
    %490 = vmatprep.subr.mxu0 0.0
    %v491 = vand.u32 %v65, 4294901760
    %v492 = vsub.f32 %v65, %v491
    %493 = vmatpush1.msra.mxu0 %v492
    %494 = vmatprep.subr.mxu0 0.0
    %v495 = vand.u32 %v64, 4294901760
    %v496 = vsub.f32 %v64, %v495
    %497 = vmatpush1.msra.mxu0 %v496
    %498 = vmatprep.subr.mxu0 0.0
    %v499 = vand.u32 %v63, 4294901760
    %v500 = vsub.f32 %v63, %v499
    %501 = vmatpush1.msra.mxu0 %v500
    %502 = vmatprep.subr.mxu0 0.0
    %v503 = vand.u32 %v62, 4294901760
    %v504 = vsub.f32 %v62, %v503
    %505 = vmatpush1.msra.mxu0 %v504
    %506 = vmatprep.subr.mxu0 0.0
    %v507 = vand.u32 %v61, 4294901760
    %v508 = vsub.f32 %v61, %v507
    %509 = vmatpush1.msra.mxu0 %v508
    %510 = vmatprep.subr.mxu0 0.0
    %v511 = vand.u32 %v60, 4294901760
    %v512 = vsub.f32 %v60, %v511
    %513 = vmatpush1.msra.mxu0 %v512
    %514 = vmatprep.subr.mxu0 0.0
    %v515 = vand.u32 %v59, 4294901760
    %v516 = vsub.f32 %v59, %v515
    %517 = vmatpush1.msra.mxu0 %v516
    %518 = vmatprep.subr.mxu0 0.0
    %v519 = vand.u32 %v58, 4294901760
    %v520 = vsub.f32 %v58, %v519
    %521 = vmatpush1.msra.mxu0 %v520
    %522 = vmatprep.subr.mxu0 0.0
    %v523 = vand.u32 %v57, 4294901760
    %v524 = vsub.f32 %v57, %v523
    %525 = vmatpush1.msra.mxu0 %v524
    %526 = vmatprep.subr.mxu0 0.0
    %v527 = vand.u32 %v56, 4294901760
    %v528 = vsub.f32 %v56, %v527
    %529 = vmatpush1.msra.mxu0 %v528
    %530 = vmatprep.subr.mxu0 0.0
    %v531 = vand.u32 %v55, 4294901760
    %v532 = vsub.f32 %v55, %v531
    %533 = vmatpush1.msra.mxu0 %v532
    %534 = vmatprep.subr.mxu0 0.0
    %v535 = vand.u32 %v54, 4294901760
    %v536 = vsub.f32 %v54, %v535
    %537 = vmatpush1.msra.mxu0 %v536
    %538 = vmatprep.subr.mxu0 0.0
    %v539 = vand.u32 %v53, 4294901760
    %v540 = vsub.f32 %v53, %v539
    %541 = vmatpush1.msra.mxu0 %v540
    %542 = vmatprep.subr.mxu0 0.0
    %v543 = vand.u32 %v52, 4294901760
    %v544 = vsub.f32 %v52, %v543
    %545 = vmatpush1.msra.mxu0 %v544
    %546 = vmatprep.subr.mxu0 0.0
    %v547 = vand.u32 %v83, 4294901760
    %v548 = vsub.f32 %v83, %v547
    %549 = vmatpush2.msra.mxu0 %v548
    %550 = vmatprep.subr.mxu0 0.0
    %v551 = vand.u32 %v82, 4294901760
    %v552 = vsub.f32 %v82, %v551
    %553 = vmatpush2.msra.mxu0 %v552
    %554 = vmatprep.subr.mxu0 0.0
    %v555 = vand.u32 %v81, 4294901760
    %v556 = vsub.f32 %v81, %v555
    %557 = vmatpush2.msra.mxu0 %v556
    %558 = vmatprep.subr.mxu0 0.0
    %v559 = vand.u32 %v80, 4294901760
    %v560 = vsub.f32 %v80, %v559
    %561 = vmatpush2.msra.mxu0 %v560
    %562 = vmatprep.subr.mxu0 0.0
    %v563 = vand.u32 %v79, 4294901760
    %v564 = vsub.f32 %v79, %v563
    %565 = vmatpush2.msra.mxu0 %v564
    %566 = vmatprep.subr.mxu0 0.0
    %v567 = vand.u32 %v78, 4294901760
    %v568 = vsub.f32 %v78, %v567
    %569 = vmatpush2.msra.mxu0 %v568
    %570 = vmatprep.subr.mxu0 0.0
    %v571 = vand.u32 %v77, 4294901760
    %v572 = vsub.f32 %v77, %v571
    %573 = vmatpush2.msra.mxu0 %v572
    %574 = vmatprep.subr.mxu0 0.0
    %v575 = vand.u32 %v76, 4294901760
    %v576 = vsub.f32 %v76, %v575
    %577 = vmatpush2.msra.mxu0 %v576
    %578 = vmatprep.subr.mxu0 0.0
    %v579 = vand.u32 %v75, 4294901760
    %v580 = vsub.f32 %v75, %v579
    %581 = vmatpush2.msra.mxu0 %v580
    %582 = vmatprep.subr.mxu0 0.0
    %v583 = vand.u32 %v74, 4294901760
    %v584 = vsub.f32 %v74, %v583
    %585 = vmatpush2.msra.mxu0 %v584
    %586 = vmatprep.subr.mxu0 0.0
    %v587 = vand.u32 %v73, 4294901760
    %v588 = vsub.f32 %v73, %v587
    %589 = vmatpush2.msra.mxu0 %v588
    %590 = vmatprep.subr.mxu0 0.0
    %v591 = vand.u32 %v72, 4294901760
    %v592 = vsub.f32 %v72, %v591
    %593 = vmatpush2.msra.mxu0 %v592
    %594 = vmatprep.subr.mxu0 0.0
    %v595 = vand.u32 %v71, 4294901760
    %v596 = vsub.f32 %v71, %v595
    %597 = vmatpush2.msra.mxu0 %v596
    %598 = vmatprep.subr.mxu0 0.0
    %v599 = vand.u32 %v70, 4294901760
    %v600 = vsub.f32 %v70, %v599
    %601 = vmatpush2.msra.mxu0 %v600
    %602 = vmatprep.subr.mxu0 0.0
    %v603 = vand.u32 %v69, 4294901760
    %v604 = vsub.f32 %v69, %v603
    %605 = vmatpush2.msra.mxu0 %v604
    %606 = vmatprep.subr.mxu0 0.0
    %v607 = vand.u32 %v68, 4294901760
    %v608 = vsub.f32 %v68, %v607
    %609 = vmatpush2.msra.mxu0 %v608
    %v610 = vand.u32 %v45, 4294901760
    %v611 = vsub.f32 %v45, %v610
    %612 = vmatprep.mubr.f32.mxu0 %v611
    %v613 = vand.u32 %v44, 4294901760
    %v614 = vsub.f32 %v44, %v613
    %615 = vmatmul.mubr.f32.gmra.mxu0 %v614
    %v616 = vpop.f32.mrf.mxu0
    %v617 = vadd.f32 %v472, %v616
    %v618 = vpop.f32.mrf.mxu0
    %v619 = vand.u32 %v49, 4294901760
    %v620 = vsub.f32 %v49, %v619
    %621 = vmatprep.mubr.f32.mxu0 %v620
    %v622 = vand.u32 %v48, 4294901760
    %v623 = vsub.f32 %v48, %v622
    %624 = vmatmul.mubr.f32.gmra.mxu0 %v623
    %v625 = vpop.f32.mrf.mxu0
    %v626 = vadd.f32 %v479, %v625
    %v627 = vpop.f32.mrf.mxu0
    %628 = vdwg.mxu0
    %629 = vmatprep.subr.mxu0 0.0
    %v630 = vand.u32 %v67, 4294901760
    %631 = vmatpush1.msra.mxu0 %v630
    %632 = vmatprep.subr.mxu0 0.0
    %v633 = vand.u32 %v66, 4294901760
    %634 = vmatpush1.msra.mxu0 %v633
    %635 = vmatprep.subr.mxu0 0.0
    %v636 = vand.u32 %v65, 4294901760
    %637 = vmatpush1.msra.mxu0 %v636
    %638 = vmatprep.subr.mxu0 0.0
    %v639 = vand.u32 %v64, 4294901760
    %640 = vmatpush1.msra.mxu0 %v639
    %641 = vmatprep.subr.mxu0 0.0
    %v642 = vand.u32 %v63, 4294901760
    %643 = vmatpush1.msra.mxu0 %v642
    %644 = vmatprep.subr.mxu0 0.0
    %v645 = vand.u32 %v62, 4294901760
    %646 = vmatpush1.msra.mxu0 %v645
    %647 = vmatprep.subr.mxu0 0.0
    %v648 = vand.u32 %v61, 4294901760
    %649 = vmatpush1.msra.mxu0 %v648
    %650 = vmatprep.subr.mxu0 0.0
    %v651 = vand.u32 %v60, 4294901760
    %652 = vmatpush1.msra.mxu0 %v651
    %653 = vmatprep.subr.mxu0 0.0
    %v654 = vand.u32 %v59, 4294901760
    %655 = vmatpush1.msra.mxu0 %v654
    %656 = vmatprep.subr.mxu0 0.0
    %v657 = vand.u32 %v58, 4294901760
    %658 = vmatpush1.msra.mxu0 %v657
    %659 = vmatprep.subr.mxu0 0.0
    %v660 = vand.u32 %v57, 4294901760
    %661 = vmatpush1.msra.mxu0 %v660
    %662 = vmatprep.subr.mxu0 0.0
    %v663 = vand.u32 %v56, 4294901760
    %664 = vmatpush1.msra.mxu0 %v663
    %665 = vmatprep.subr.mxu0 0.0
    %v666 = vand.u32 %v55, 4294901760
    %667 = vmatpush1.msra.mxu0 %v666
    %668 = vmatprep.subr.mxu0 0.0
    %v669 = vand.u32 %v54, 4294901760
    %670 = vmatpush1.msra.mxu0 %v669
    %671 = vmatprep.subr.mxu0 0.0
    %v672 = vand.u32 %v53, 4294901760
    %673 = vmatpush1.msra.mxu0 %v672
    %674 = vmatprep.subr.mxu0 0.0
    %v675 = vand.u32 %v52, 4294901760
    %676 = vmatpush1.msra.mxu0 %v675
    %677 = vmatprep.subr.mxu0 0.0
    %v678 = vand.u32 %v83, 4294901760
    %679 = vmatpush2.msra.mxu0 %v678
    %680 = vmatprep.subr.mxu0 0.0
    %v681 = vand.u32 %v82, 4294901760
    %682 = vmatpush2.msra.mxu0 %v681
    %683 = vmatprep.subr.mxu0 0.0
    %v684 = vand.u32 %v81, 4294901760
    %685 = vmatpush2.msra.mxu0 %v684
    %686 = vmatprep.subr.mxu0 0.0
    %v687 = vand.u32 %v80, 4294901760
    %688 = vmatpush2.msra.mxu0 %v687
    %689 = vmatprep.subr.mxu0 0.0
    %v690 = vand.u32 %v79, 4294901760
    %691 = vmatpush2.msra.mxu0 %v690
    %692 = vmatprep.subr.mxu0 0.0
    %v693 = vand.u32 %v78, 4294901760
    %694 = vmatpush2.msra.mxu0 %v693
    %695 = vmatprep.subr.mxu0 0.0
    %v696 = vand.u32 %v77, 4294901760
    %697 = vmatpush2.msra.mxu0 %v696
    %698 = vmatprep.subr.mxu0 0.0
    %v699 = vand.u32 %v76, 4294901760
    %700 = vmatpush2.msra.mxu0 %v699
    %701 = vmatprep.subr.mxu0 0.0
    %v702 = vand.u32 %v75, 4294901760
    %703 = vmatpush2.msra.mxu0 %v702
    %704 = vmatprep.subr.mxu0 0.0
    %v705 = vand.u32 %v74, 4294901760
    %706 = vmatpush2.msra.mxu0 %v705
    %707 = vmatprep.subr.mxu0 0.0
    %v708 = vand.u32 %v73, 4294901760
    %709 = vmatpush2.msra.mxu0 %v708
    %710 = vmatprep.subr.mxu0 0.0
    %v711 = vand.u32 %v72, 4294901760
    %712 = vmatpush2.msra.mxu0 %v711
    %713 = vmatprep.subr.mxu0 0.0
    %v714 = vand.u32 %v71, 4294901760
    %715 = vmatpush2.msra.mxu0 %v714
    %716 = vmatprep.subr.mxu0 0.0
    %v717 = vand.u32 %v70, 4294901760
    %718 = vmatpush2.msra.mxu0 %v717
    %719 = vmatprep.subr.mxu0 0.0
    %v720 = vand.u32 %v69, 4294901760
    %721 = vmatpush2.msra.mxu0 %v720
    %722 = vmatprep.subr.mxu0 0.0
    %v723 = vand.u32 %v68, 4294901760
    %724 = vmatpush2.msra.mxu0 %v723
    %v725 = vand.u32 %v45, 4294901760
    %v726 = vsub.f32 %v45, %v725
    %v727 = vand.u32 %v726, 4294901760
    %728 = vmatprep.mubr.f32.mxu0 %v727
    %v729 = vand.u32 %v44, 4294901760
    %v730 = vsub.f32 %v44, %v729
    %v731 = vand.u32 %v730, 4294901760
    %732 = vmatmul.mubr.f32.gmra.mxu0 %v731
    %v733 = vpop.f32.mrf.mxu0
    %v734 = vadd.f32 %v617, %v733
    %v735 = vpop.f32.mrf.mxu0
    %v736 = vand.u32 %v49, 4294901760
    %v737 = vsub.f32 %v49, %v736
    %v738 = vand.u32 %v737, 4294901760
    %739 = vmatprep.mubr.f32.mxu0 %v738
    %v740 = vand.u32 %v48, 4294901760
    %v741 = vsub.f32 %v48, %v740
    %v742 = vand.u32 %v741, 4294901760
    %743 = vmatmul.mubr.f32.gmra.mxu0 %v742
    %v744 = vpop.f32.mrf.mxu0
    %v745 = vadd.f32 %v626, %v744
    %v746 = vpop.f32.mrf.mxu0
    %747 = vdwg.mxu0
    %748 = vmatprep.subr.mxu0 0.0
    %v749 = vand.u32 %v67, 4294901760
    %v750 = vsub.f32 %v67, %v749
    %v751 = vand.u32 %v750, 4294901760
    %752 = vmatpush1.msra.mxu0 %v751
    %753 = vmatprep.subr.mxu0 0.0
    %v754 = vand.u32 %v66, 4294901760
    %v755 = vsub.f32 %v66, %v754
    %v756 = vand.u32 %v755, 4294901760
    %757 = vmatpush1.msra.mxu0 %v756
    %758 = vmatprep.subr.mxu0 0.0
    %v759 = vand.u32 %v65, 4294901760
    %v760 = vsub.f32 %v65, %v759
    %v761 = vand.u32 %v760, 4294901760
    %762 = vmatpush1.msra.mxu0 %v761
    %763 = vmatprep.subr.mxu0 0.0
    %v764 = vand.u32 %v64, 4294901760
    %v765 = vsub.f32 %v64, %v764
    %v766 = vand.u32 %v765, 4294901760
    %767 = vmatpush1.msra.mxu0 %v766
    %768 = vmatprep.subr.mxu0 0.0
    %v769 = vand.u32 %v63, 4294901760
    %v770 = vsub.f32 %v63, %v769
    %v771 = vand.u32 %v770, 4294901760
    %772 = vmatpush1.msra.mxu0 %v771
    %773 = vmatprep.subr.mxu0 0.0
    %v774 = vand.u32 %v62, 4294901760
    %v775 = vsub.f32 %v62, %v774
    %v776 = vand.u32 %v775, 4294901760
    %777 = vmatpush1.msra.mxu0 %v776
    %778 = vmatprep.subr.mxu0 0.0
    %v779 = vand.u32 %v61, 4294901760
    %v780 = vsub.f32 %v61, %v779
    %v781 = vand.u32 %v780, 4294901760
    %782 = vmatpush1.msra.mxu0 %v781
    %783 = vmatprep.subr.mxu0 0.0
    %v784 = vand.u32 %v60, 4294901760
    %v785 = vsub.f32 %v60, %v784
    %v786 = vand.u32 %v785, 4294901760
    %787 = vmatpush1.msra.mxu0 %v786
    %788 = vmatprep.subr.mxu0 0.0
    %v789 = vand.u32 %v59, 4294901760
    %v790 = vsub.f32 %v59, %v789
    %v791 = vand.u32 %v790, 4294901760
    %792 = vmatpush1.msra.mxu0 %v791
    %793 = vmatprep.subr.mxu0 0.0
    %v794 = vand.u32 %v58, 4294901760
    %v795 = vsub.f32 %v58, %v794
    %v796 = vand.u32 %v795, 4294901760
    %797 = vmatpush1.msra.mxu0 %v796
    %798 = vmatprep.subr.mxu0 0.0
    %v799 = vand.u32 %v57, 4294901760
    %v800 = vsub.f32 %v57, %v799
    %v801 = vand.u32 %v800, 4294901760
    %802 = vmatpush1.msra.mxu0 %v801
    %803 = vmatprep.subr.mxu0 0.0
    %v804 = vand.u32 %v56, 4294901760
    %v805 = vsub.f32 %v56, %v804
    %v806 = vand.u32 %v805, 4294901760
    %807 = vmatpush1.msra.mxu0 %v806
    %808 = vmatprep.subr.mxu0 0.0
    %v809 = vand.u32 %v55, 4294901760
    %v810 = vsub.f32 %v55, %v809
    %v811 = vand.u32 %v810, 4294901760
    %812 = vmatpush1.msra.mxu0 %v811
    %813 = vmatprep.subr.mxu0 0.0
    %v814 = vand.u32 %v54, 4294901760
    %v815 = vsub.f32 %v54, %v814
    %v816 = vand.u32 %v815, 4294901760
    %817 = vmatpush1.msra.mxu0 %v816
    %818 = vmatprep.subr.mxu0 0.0
    %v819 = vand.u32 %v53, 4294901760
    %v820 = vsub.f32 %v53, %v819
    %v821 = vand.u32 %v820, 4294901760
    %822 = vmatpush1.msra.mxu0 %v821
    %823 = vmatprep.subr.mxu0 0.0
    %v824 = vand.u32 %v52, 4294901760
    %v825 = vsub.f32 %v52, %v824
    %v826 = vand.u32 %v825, 4294901760
    %827 = vmatpush1.msra.mxu0 %v826
    %828 = vmatprep.subr.mxu0 0.0
    %v829 = vand.u32 %v83, 4294901760
    %v830 = vsub.f32 %v83, %v829
    %v831 = vand.u32 %v830, 4294901760
    %832 = vmatpush2.msra.mxu0 %v831
    %833 = vmatprep.subr.mxu0 0.0
    %v834 = vand.u32 %v82, 4294901760
    %v835 = vsub.f32 %v82, %v834
    %v836 = vand.u32 %v835, 4294901760
    %837 = vmatpush2.msra.mxu0 %v836
    %838 = vmatprep.subr.mxu0 0.0
    %v839 = vand.u32 %v81, 4294901760
    %v840 = vsub.f32 %v81, %v839
    %v841 = vand.u32 %v840, 4294901760
    %842 = vmatpush2.msra.mxu0 %v841
    %843 = vmatprep.subr.mxu0 0.0
    %v844 = vand.u32 %v80, 4294901760
    %v845 = vsub.f32 %v80, %v844
    %v846 = vand.u32 %v845, 4294901760
    %847 = vmatpush2.msra.mxu0 %v846
    %848 = vmatprep.subr.mxu0 0.0
    %v849 = vand.u32 %v79, 4294901760
    %v850 = vsub.f32 %v79, %v849
    %v851 = vand.u32 %v850, 4294901760
    %852 = vmatpush2.msra.mxu0 %v851
    %853 = vmatprep.subr.mxu0 0.0
    %v854 = vand.u32 %v78, 4294901760
    %v855 = vsub.f32 %v78, %v854
    %v856 = vand.u32 %v855, 4294901760
    %857 = vmatpush2.msra.mxu0 %v856
    %858 = vmatprep.subr.mxu0 0.0
    %v859 = vand.u32 %v77, 4294901760
    %v860 = vsub.f32 %v77, %v859
    %v861 = vand.u32 %v860, 4294901760
    %862 = vmatpush2.msra.mxu0 %v861
    %863 = vmatprep.subr.mxu0 0.0
    %v864 = vand.u32 %v76, 4294901760
    %v865 = vsub.f32 %v76, %v864
    %v866 = vand.u32 %v865, 4294901760
    %867 = vmatpush2.msra.mxu0 %v866
    %868 = vmatprep.subr.mxu0 0.0
    %v869 = vand.u32 %v75, 4294901760
    %v870 = vsub.f32 %v75, %v869
    %v871 = vand.u32 %v870, 4294901760
    %872 = vmatpush2.msra.mxu0 %v871
    %873 = vmatprep.subr.mxu0 0.0
    %v874 = vand.u32 %v74, 4294901760
    %v875 = vsub.f32 %v74, %v874
    %v876 = vand.u32 %v875, 4294901760
    %877 = vmatpush2.msra.mxu0 %v876
    %878 = vmatprep.subr.mxu0 0.0
    %v879 = vand.u32 %v73, 4294901760
    %v880 = vsub.f32 %v73, %v879
    %v881 = vand.u32 %v880, 4294901760
    %882 = vmatpush2.msra.mxu0 %v881
    %883 = vmatprep.subr.mxu0 0.0
    %v884 = vand.u32 %v72, 4294901760
    %v885 = vsub.f32 %v72, %v884
    %v886 = vand.u32 %v885, 4294901760
    %887 = vmatpush2.msra.mxu0 %v886
    %888 = vmatprep.subr.mxu0 0.0
    %v889 = vand.u32 %v71, 4294901760
    %v890 = vsub.f32 %v71, %v889
    %v891 = vand.u32 %v890, 4294901760
    %892 = vmatpush2.msra.mxu0 %v891
    %893 = vmatprep.subr.mxu0 0.0
    %v894 = vand.u32 %v70, 4294901760
    %v895 = vsub.f32 %v70, %v894
    %v896 = vand.u32 %v895, 4294901760
    %897 = vmatpush2.msra.mxu0 %v896
    %898 = vmatprep.subr.mxu0 0.0
    %v899 = vand.u32 %v69, 4294901760
    %v900 = vsub.f32 %v69, %v899
    %v901 = vand.u32 %v900, 4294901760
    %902 = vmatpush2.msra.mxu0 %v901
    %903 = vmatprep.subr.mxu0 0.0
    %v904 = vand.u32 %v68, 4294901760
    %v905 = vsub.f32 %v68, %v904
    %v906 = vand.u32 %v905, 4294901760
    %907 = vmatpush2.msra.mxu0 %v906
    %v908 = vand.u32 %v45, 4294901760
    %909 = vmatprep.mubr.f32.mxu0 %v908
    %v910 = vand.u32 %v44, 4294901760
    %911 = vmatmul.mubr.f32.gmra.mxu0 %v910
    %v912 = vpop.f32.mrf.mxu0
    %v913 = vadd.f32 %v734, %v912
    %v914 = vpop.f32.mrf.mxu0
    %v915 = vand.u32 %v49, 4294901760
    %916 = vmatprep.mubr.f32.mxu0 %v915
    %v917 = vand.u32 %v48, 4294901760
    %918 = vmatmul.mubr.f32.gmra.mxu0 %v917
    %v919 = vpop.f32.mrf.mxu0
    %v920 = vadd.f32 %v745, %v919
    %v921 = vpop.f32.mrf.mxu0
    %922 = vdwg.mxu0
    %923 = vmatprep.subr.mxu0 0.0
    %v924 = vand.u32 %v67, 4294901760
    %925 = vmatpush1.msra.mxu0 %v924
    %926 = vmatprep.subr.mxu0 0.0
    %v927 = vand.u32 %v66, 4294901760
    %928 = vmatpush1.msra.mxu0 %v927
    %929 = vmatprep.subr.mxu0 0.0
    %v930 = vand.u32 %v65, 4294901760
    %931 = vmatpush1.msra.mxu0 %v930
    %932 = vmatprep.subr.mxu0 0.0
    %v933 = vand.u32 %v64, 4294901760
    %934 = vmatpush1.msra.mxu0 %v933
    %935 = vmatprep.subr.mxu0 0.0
    %v936 = vand.u32 %v63, 4294901760
    %937 = vmatpush1.msra.mxu0 %v936
    %938 = vmatprep.subr.mxu0 0.0
    %v939 = vand.u32 %v62, 4294901760
    %940 = vmatpush1.msra.mxu0 %v939
    %941 = vmatprep.subr.mxu0 0.0
    %v942 = vand.u32 %v61, 4294901760
    %943 = vmatpush1.msra.mxu0 %v942
    %944 = vmatprep.subr.mxu0 0.0
    %v945 = vand.u32 %v60, 4294901760
    %946 = vmatpush1.msra.mxu0 %v945
    %947 = vmatprep.subr.mxu0 0.0
    %v948 = vand.u32 %v59, 4294901760
    %949 = vmatpush1.msra.mxu0 %v948
    %950 = vmatprep.subr.mxu0 0.0
    %v951 = vand.u32 %v58, 4294901760
    %952 = vmatpush1.msra.mxu0 %v951
    %953 = vmatprep.subr.mxu0 0.0
    %v954 = vand.u32 %v57, 4294901760
    %955 = vmatpush1.msra.mxu0 %v954
    %956 = vmatprep.subr.mxu0 0.0
    %v957 = vand.u32 %v56, 4294901760
    %958 = vmatpush1.msra.mxu0 %v957
    %959 = vmatprep.subr.mxu0 0.0
    %v960 = vand.u32 %v55, 4294901760
    %961 = vmatpush1.msra.mxu0 %v960
    %962 = vmatprep.subr.mxu0 0.0
    %v963 = vand.u32 %v54, 4294901760
    %964 = vmatpush1.msra.mxu0 %v963
    %965 = vmatprep.subr.mxu0 0.0
    %v966 = vand.u32 %v53, 4294901760
    %967 = vmatpush1.msra.mxu0 %v966
    %968 = vmatprep.subr.mxu0 0.0
    %v969 = vand.u32 %v52, 4294901760
    %970 = vmatpush1.msra.mxu0 %v969
    %971 = vmatprep.subr.mxu0 0.0
    %v972 = vand.u32 %v83, 4294901760
    %973 = vmatpush2.msra.mxu0 %v972
    %974 = vmatprep.subr.mxu0 0.0
    %v975 = vand.u32 %v82, 4294901760
    %976 = vmatpush2.msra.mxu0 %v975
    %977 = vmatprep.subr.mxu0 0.0
    %v978 = vand.u32 %v81, 4294901760
    %979 = vmatpush2.msra.mxu0 %v978
    %980 = vmatprep.subr.mxu0 0.0
    %v981 = vand.u32 %v80, 4294901760
    %982 = vmatpush2.msra.mxu0 %v981
    %983 = vmatprep.subr.mxu0 0.0
    %v984 = vand.u32 %v79, 4294901760
    %985 = vmatpush2.msra.mxu0 %v984
    %986 = vmatprep.subr.mxu0 0.0
    %v987 = vand.u32 %v78, 4294901760
    %988 = vmatpush2.msra.mxu0 %v987
    %989 = vmatprep.subr.mxu0 0.0
    %v990 = vand.u32 %v77, 4294901760
    %991 = vmatpush2.msra.mxu0 %v990
    %992 = vmatprep.subr.mxu0 0.0
    %v993 = vand.u32 %v76, 4294901760
    %994 = vmatpush2.msra.mxu0 %v993
    %995 = vmatprep.subr.mxu0 0.0
    %v996 = vand.u32 %v75, 4294901760
    %997 = vmatpush2.msra.mxu0 %v996
    %998 = vmatprep.subr.mxu0 0.0
    %v999 = vand.u32 %v74, 4294901760
    %1000 = vmatpush2.msra.mxu0 %v999
    %1001 = vmatprep.subr.mxu0 0.0
    %v1002 = vand.u32 %v73, 4294901760
    %1003 = vmatpush2.msra.mxu0 %v1002
    %1004 = vmatprep.subr.mxu0 0.0
    %v1005 = vand.u32 %v72, 4294901760
    %1006 = vmatpush2.msra.mxu0 %v1005
    %1007 = vmatprep.subr.mxu0 0.0
    %v1008 = vand.u32 %v71, 4294901760
    %1009 = vmatpush2.msra.mxu0 %v1008
    %1010 = vmatprep.subr.mxu0 0.0
    %v1011 = vand.u32 %v70, 4294901760
    %1012 = vmatpush2.msra.mxu0 %v1011
    %1013 = vmatprep.subr.mxu0 0.0
    %v1014 = vand.u32 %v69, 4294901760
    %1015 = vmatpush2.msra.mxu0 %v1014
    %1016 = vmatprep.subr.mxu0 0.0
    %v1017 = vand.u32 %v68, 4294901760
    %1018 = vmatpush2.msra.mxu0 %v1017
    %v1019 = vand.u32 %v45, 4294901760
    %1020 = vmatprep.mubr.f32.mxu0 %v1019
    %v1021 = vand.u32 %v44, 4294901760
    %1022 = vmatmul.mubr.f32.gmra.mxu0 %v1021
    %v1023 = vpop.f32.mrf.mxu0
    %v1024 = vadd.f32 %v913, %v1023
    %v1025 = vpop.f32.mrf.mxu0
    %v1026 = vand.u32 %v49, 4294901760
    %1027 = vmatprep.mubr.f32.mxu0 %v1026
    %v1028 = vand.u32 %v48, 4294901760
    %1029 = vmatmul.mubr.f32.gmra.mxu0 %v1028
    %v1030 = vpop.f32.mrf.mxu0
    %v1031 = vadd.f32 %v920, %v1030
    %v1032 = vpop.f32.mrf.mxu0
    %1033 = vdwg.mxu0
    %1034 = vmatprep.subr.mxu0 0.0
    %v1035 = vand.u32 %v99, 4294901760
    %1036 = vmatpush1.msra.mxu0 %v1035
    %1037 = vmatprep.subr.mxu0 0.0
    %v1038 = vand.u32 %v98, 4294901760
    %1039 = vmatpush1.msra.mxu0 %v1038
    %1040 = vmatprep.subr.mxu0 0.0
    %v1041 = vand.u32 %v97, 4294901760
    %1042 = vmatpush1.msra.mxu0 %v1041
    %1043 = vmatprep.subr.mxu0 0.0
    %v1044 = vand.u32 %v96, 4294901760
    %1045 = vmatpush1.msra.mxu0 %v1044
    %1046 = vmatprep.subr.mxu0 0.0
    %v1047 = vand.u32 %v95, 4294901760
    %1048 = vmatpush1.msra.mxu0 %v1047
    %1049 = vmatprep.subr.mxu0 0.0
    %v1050 = vand.u32 %v94, 4294901760
    %1051 = vmatpush1.msra.mxu0 %v1050
    %1052 = vmatprep.subr.mxu0 0.0
    %v1053 = vand.u32 %v93, 4294901760
    %1054 = vmatpush1.msra.mxu0 %v1053
    %1055 = vmatprep.subr.mxu0 0.0
    %v1056 = vand.u32 %v92, 4294901760
    %1057 = vmatpush1.msra.mxu0 %v1056
    %1058 = vmatprep.subr.mxu0 0.0
    %v1059 = vand.u32 %v91, 4294901760
    %1060 = vmatpush1.msra.mxu0 %v1059
    %1061 = vmatprep.subr.mxu0 0.0
    %v1062 = vand.u32 %v90, 4294901760
    %1063 = vmatpush1.msra.mxu0 %v1062
    %1064 = vmatprep.subr.mxu0 0.0
    %v1065 = vand.u32 %v89, 4294901760
    %1066 = vmatpush1.msra.mxu0 %v1065
    %1067 = vmatprep.subr.mxu0 0.0
    %v1068 = vand.u32 %v88, 4294901760
    %1069 = vmatpush1.msra.mxu0 %v1068
    %1070 = vmatprep.subr.mxu0 0.0
    %v1071 = vand.u32 %v87, 4294901760
    %1072 = vmatpush1.msra.mxu0 %v1071
    %1073 = vmatprep.subr.mxu0 0.0
    %v1074 = vand.u32 %v86, 4294901760
    %1075 = vmatpush1.msra.mxu0 %v1074
    %1076 = vmatprep.subr.mxu0 0.0
    %v1077 = vand.u32 %v85, 4294901760
    %1078 = vmatpush1.msra.mxu0 %v1077
    %1079 = vmatprep.subr.mxu0 0.0
    %v1080 = vand.u32 %v84, 4294901760
    %1081 = vmatpush1.msra.mxu0 %v1080
    %1082 = vmatprep.subr.mxu0 0.0
    %v1083 = vand.u32 %v115, 4294901760
    %1084 = vmatpush2.msra.mxu0 %v1083
    %1085 = vmatprep.subr.mxu0 0.0
    %v1086 = vand.u32 %v114, 4294901760
    %1087 = vmatpush2.msra.mxu0 %v1086
    %1088 = vmatprep.subr.mxu0 0.0
    %v1089 = vand.u32 %v113, 4294901760
    %1090 = vmatpush2.msra.mxu0 %v1089
    %1091 = vmatprep.subr.mxu0 0.0
    %v1092 = vand.u32 %v112, 4294901760
    %1093 = vmatpush2.msra.mxu0 %v1092
    %1094 = vmatprep.subr.mxu0 0.0
    %v1095 = vand.u32 %v111, 4294901760
    %1096 = vmatpush2.msra.mxu0 %v1095
    %1097 = vmatprep.subr.mxu0 0.0
    %v1098 = vand.u32 %v110, 4294901760
    %1099 = vmatpush2.msra.mxu0 %v1098
    %1100 = vmatprep.subr.mxu0 0.0
    %v1101 = vand.u32 %v109, 4294901760
    %1102 = vmatpush2.msra.mxu0 %v1101
    %1103 = vmatprep.subr.mxu0 0.0
    %v1104 = vand.u32 %v108, 4294901760
    %1105 = vmatpush2.msra.mxu0 %v1104
    %1106 = vmatprep.subr.mxu0 0.0
    %v1107 = vand.u32 %v107, 4294901760
    %1108 = vmatpush2.msra.mxu0 %v1107
    %1109 = vmatprep.subr.mxu0 0.0
    %v1110 = vand.u32 %v106, 4294901760
    %1111 = vmatpush2.msra.mxu0 %v1110
    %1112 = vmatprep.subr.mxu0 0.0
    %v1113 = vand.u32 %v105, 4294901760
    %1114 = vmatpush2.msra.mxu0 %v1113
    %1115 = vmatprep.subr.mxu0 0.0
    %v1116 = vand.u32 %v104, 4294901760
    %1117 = vmatpush2.msra.mxu0 %v1116
    %1118 = vmatprep.subr.mxu0 0.0
    %v1119 = vand.u32 %v103, 4294901760
    %1120 = vmatpush2.msra.mxu0 %v1119
    %1121 = vmatprep.subr.mxu0 0.0
    %v1122 = vand.u32 %v102, 4294901760
    %1123 = vmatpush2.msra.mxu0 %v1122
    %1124 = vmatprep.subr.mxu0 0.0
    %v1125 = vand.u32 %v101, 4294901760
    %1126 = vmatpush2.msra.mxu0 %v1125
    %1127 = vmatprep.subr.mxu0 0.0
    %v1128 = vand.u32 %v100, 4294901760
    %1129 = vmatpush2.msra.mxu0 %v1128
    %v1130 = vand.u32 %v47, 4294901760
    %v1131 = vsub.f32 %v47, %v1130
    %v1132 = vand.u32 %v1131, 4294901760
    %v1133 = vsub.f32 %v1131, %v1132
    %v1134 = vand.u32 %v1133, 4294901760
    %1135 = vmatprep.mubr.f32.mxu0 %v1134
    %v1136 = vand.u32 %v46, 4294901760
    %v1137 = vsub.f32 %v46, %v1136
    %v1138 = vand.u32 %v1137, 4294901760
    %v1139 = vsub.f32 %v1137, %v1138
    %v1140 = vand.u32 %v1139, 4294901760
    %1141 = vmatmul.mubr.f32.gmra.mxu0 %v1140
    %v1142 = vpop.f32.mrf.mxu0
    %v1143 = vadd.f32 %v1024, %v1142
    %v1144 = vpop.f32.mrf.mxu0
    %v1145 = vand.u32 %v51, 4294901760
    %v1146 = vsub.f32 %v51, %v1145
    %v1147 = vand.u32 %v1146, 4294901760
    %v1148 = vsub.f32 %v1146, %v1147
    %v1149 = vand.u32 %v1148, 4294901760
    %1150 = vmatprep.mubr.f32.mxu0 %v1149
    %v1151 = vand.u32 %v50, 4294901760
    %v1152 = vsub.f32 %v50, %v1151
    %v1153 = vand.u32 %v1152, 4294901760
    %v1154 = vsub.f32 %v1152, %v1153
    %v1155 = vand.u32 %v1154, 4294901760
    %1156 = vmatmul.mubr.f32.gmra.mxu0 %v1155
    %v1157 = vpop.f32.mrf.mxu0
    %v1158 = vadd.f32 %v1031, %v1157
    %v1159 = vpop.f32.mrf.mxu0
    %1160 = vdwg.mxu0
    %1161 = vmatprep.subr.mxu0 0.0
    %v1162 = vand.u32 %v99, 4294901760
    %v1163 = vsub.f32 %v99, %v1162
    %v1164 = vand.u32 %v1163, 4294901760
    %v1165 = vsub.f32 %v1163, %v1164
    %v1166 = vand.u32 %v1165, 4294901760
    %1167 = vmatpush1.msra.mxu0 %v1166
    %1168 = vmatprep.subr.mxu0 0.0
    %v1169 = vand.u32 %v98, 4294901760
    %v1170 = vsub.f32 %v98, %v1169
    %v1171 = vand.u32 %v1170, 4294901760
    %v1172 = vsub.f32 %v1170, %v1171
    %v1173 = vand.u32 %v1172, 4294901760
    %1174 = vmatpush1.msra.mxu0 %v1173
    %1175 = vmatprep.subr.mxu0 0.0
    %v1176 = vand.u32 %v97, 4294901760
    %v1177 = vsub.f32 %v97, %v1176
    %v1178 = vand.u32 %v1177, 4294901760
    %v1179 = vsub.f32 %v1177, %v1178
    %v1180 = vand.u32 %v1179, 4294901760
    %1181 = vmatpush1.msra.mxu0 %v1180
    %1182 = vmatprep.subr.mxu0 0.0
    %v1183 = vand.u32 %v96, 4294901760
    %v1184 = vsub.f32 %v96, %v1183
    %v1185 = vand.u32 %v1184, 4294901760
    %v1186 = vsub.f32 %v1184, %v1185
    %v1187 = vand.u32 %v1186, 4294901760
    %1188 = vmatpush1.msra.mxu0 %v1187
    %1189 = vmatprep.subr.mxu0 0.0
    %v1190 = vand.u32 %v95, 4294901760
    %v1191 = vsub.f32 %v95, %v1190
    %v1192 = vand.u32 %v1191, 4294901760
    %v1193 = vsub.f32 %v1191, %v1192
    %v1194 = vand.u32 %v1193, 4294901760
    %1195 = vmatpush1.msra.mxu0 %v1194
    %1196 = vmatprep.subr.mxu0 0.0
    %v1197 = vand.u32 %v94, 4294901760
    %v1198 = vsub.f32 %v94, %v1197
    %v1199 = vand.u32 %v1198, 4294901760
    %v1200 = vsub.f32 %v1198, %v1199
    %v1201 = vand.u32 %v1200, 4294901760
    %1202 = vmatpush1.msra.mxu0 %v1201
    %1203 = vmatprep.subr.mxu0 0.0
    %v1204 = vand.u32 %v93, 4294901760
    %v1205 = vsub.f32 %v93, %v1204
    %v1206 = vand.u32 %v1205, 4294901760
    %v1207 = vsub.f32 %v1205, %v1206
    %v1208 = vand.u32 %v1207, 4294901760
    %1209 = vmatpush1.msra.mxu0 %v1208
    %1210 = vmatprep.subr.mxu0 0.0
    %v1211 = vand.u32 %v92, 4294901760
    %v1212 = vsub.f32 %v92, %v1211
    %v1213 = vand.u32 %v1212, 4294901760
    %v1214 = vsub.f32 %v1212, %v1213
    %v1215 = vand.u32 %v1214, 4294901760
    %1216 = vmatpush1.msra.mxu0 %v1215
    %1217 = vmatprep.subr.mxu0 0.0
    %v1218 = vand.u32 %v91, 4294901760
    %v1219 = vsub.f32 %v91, %v1218
    %v1220 = vand.u32 %v1219, 4294901760
    %v1221 = vsub.f32 %v1219, %v1220
    %v1222 = vand.u32 %v1221, 4294901760
    %1223 = vmatpush1.msra.mxu0 %v1222
    %1224 = vmatprep.subr.mxu0 0.0
    %v1225 = vand.u32 %v90, 4294901760
    %v1226 = vsub.f32 %v90, %v1225
    %v1227 = vand.u32 %v1226, 4294901760
    %v1228 = vsub.f32 %v1226, %v1227
    %v1229 = vand.u32 %v1228, 4294901760
    %1230 = vmatpush1.msra.mxu0 %v1229
    %1231 = vmatprep.subr.mxu0 0.0
    %v1232 = vand.u32 %v89, 4294901760
    %v1233 = vsub.f32 %v89, %v1232
    %v1234 = vand.u32 %v1233, 4294901760
    %v1235 = vsub.f32 %v1233, %v1234
    %v1236 = vand.u32 %v1235, 4294901760
    %1237 = vmatpush1.msra.mxu0 %v1236
    %1238 = vmatprep.subr.mxu0 0.0
    %v1239 = vand.u32 %v88, 4294901760
    %v1240 = vsub.f32 %v88, %v1239
    %v1241 = vand.u32 %v1240, 4294901760
    %v1242 = vsub.f32 %v1240, %v1241
    %v1243 = vand.u32 %v1242, 4294901760
    %1244 = vmatpush1.msra.mxu0 %v1243
    %1245 = vmatprep.subr.mxu0 0.0
    %v1246 = vand.u32 %v87, 4294901760
    %v1247 = vsub.f32 %v87, %v1246
    %v1248 = vand.u32 %v1247, 4294901760
    %v1249 = vsub.f32 %v1247, %v1248
    %v1250 = vand.u32 %v1249, 4294901760
    %1251 = vmatpush1.msra.mxu0 %v1250
    %1252 = vmatprep.subr.mxu0 0.0
    %v1253 = vand.u32 %v86, 4294901760
    %v1254 = vsub.f32 %v86, %v1253
    %v1255 = vand.u32 %v1254, 4294901760
    %v1256 = vsub.f32 %v1254, %v1255
    %v1257 = vand.u32 %v1256, 4294901760
    %1258 = vmatpush1.msra.mxu0 %v1257
    %1259 = vmatprep.subr.mxu0 0.0
    %v1260 = vand.u32 %v85, 4294901760
    %v1261 = vsub.f32 %v85, %v1260
    %v1262 = vand.u32 %v1261, 4294901760
    %v1263 = vsub.f32 %v1261, %v1262
    %v1264 = vand.u32 %v1263, 4294901760
    %1265 = vmatpush1.msra.mxu0 %v1264
    %1266 = vmatprep.subr.mxu0 0.0
    %v1267 = vand.u32 %v84, 4294901760
    %v1268 = vsub.f32 %v84, %v1267
    %v1269 = vand.u32 %v1268, 4294901760
    %v1270 = vsub.f32 %v1268, %v1269
    %v1271 = vand.u32 %v1270, 4294901760
    %1272 = vmatpush1.msra.mxu0 %v1271
    %1273 = vmatprep.subr.mxu0 0.0
    %v1274 = vand.u32 %v115, 4294901760
    %v1275 = vsub.f32 %v115, %v1274
    %v1276 = vand.u32 %v1275, 4294901760
    %v1277 = vsub.f32 %v1275, %v1276
    %v1278 = vand.u32 %v1277, 4294901760
    %1279 = vmatpush2.msra.mxu0 %v1278
    %1280 = vmatprep.subr.mxu0 0.0
    %v1281 = vand.u32 %v114, 4294901760
    %v1282 = vsub.f32 %v114, %v1281
    %v1283 = vand.u32 %v1282, 4294901760
    %v1284 = vsub.f32 %v1282, %v1283
    %v1285 = vand.u32 %v1284, 4294901760
    %1286 = vmatpush2.msra.mxu0 %v1285
    %1287 = vmatprep.subr.mxu0 0.0
    %v1288 = vand.u32 %v113, 4294901760
    %v1289 = vsub.f32 %v113, %v1288
    %v1290 = vand.u32 %v1289, 4294901760
    %v1291 = vsub.f32 %v1289, %v1290
    %v1292 = vand.u32 %v1291, 4294901760
    %1293 = vmatpush2.msra.mxu0 %v1292
    %1294 = vmatprep.subr.mxu0 0.0
    %v1295 = vand.u32 %v112, 4294901760
    %v1296 = vsub.f32 %v112, %v1295
    %v1297 = vand.u32 %v1296, 4294901760
    %v1298 = vsub.f32 %v1296, %v1297
    %v1299 = vand.u32 %v1298, 4294901760
    %1300 = vmatpush2.msra.mxu0 %v1299
    %1301 = vmatprep.subr.mxu0 0.0
    %v1302 = vand.u32 %v111, 4294901760
    %v1303 = vsub.f32 %v111, %v1302
    %v1304 = vand.u32 %v1303, 4294901760
    %v1305 = vsub.f32 %v1303, %v1304
    %v1306 = vand.u32 %v1305, 4294901760
    %1307 = vmatpush2.msra.mxu0 %v1306
    %1308 = vmatprep.subr.mxu0 0.0
    %v1309 = vand.u32 %v110, 4294901760
    %v1310 = vsub.f32 %v110, %v1309
    %v1311 = vand.u32 %v1310, 4294901760
    %v1312 = vsub.f32 %v1310, %v1311
    %v1313 = vand.u32 %v1312, 4294901760
    %1314 = vmatpush2.msra.mxu0 %v1313
    %1315 = vmatprep.subr.mxu0 0.0
    %v1316 = vand.u32 %v109, 4294901760
    %v1317 = vsub.f32 %v109, %v1316
    %v1318 = vand.u32 %v1317, 4294901760
    %v1319 = vsub.f32 %v1317, %v1318
    %v1320 = vand.u32 %v1319, 4294901760
    %1321 = vmatpush2.msra.mxu0 %v1320
    %1322 = vmatprep.subr.mxu0 0.0
    %v1323 = vand.u32 %v108, 4294901760
    %v1324 = vsub.f32 %v108, %v1323
    %v1325 = vand.u32 %v1324, 4294901760
    %v1326 = vsub.f32 %v1324, %v1325
    %v1327 = vand.u32 %v1326, 4294901760
    %1328 = vmatpush2.msra.mxu0 %v1327
    %1329 = vmatprep.subr.mxu0 0.0
    %v1330 = vand.u32 %v107, 4294901760
    %v1331 = vsub.f32 %v107, %v1330
    %v1332 = vand.u32 %v1331, 4294901760
    %v1333 = vsub.f32 %v1331, %v1332
    %v1334 = vand.u32 %v1333, 4294901760
    %1335 = vmatpush2.msra.mxu0 %v1334
    %1336 = vmatprep.subr.mxu0 0.0
    %v1337 = vand.u32 %v106, 4294901760
    %v1338 = vsub.f32 %v106, %v1337
    %v1339 = vand.u32 %v1338, 4294901760
    %v1340 = vsub.f32 %v1338, %v1339
    %v1341 = vand.u32 %v1340, 4294901760
    %1342 = vmatpush2.msra.mxu0 %v1341
    %1343 = vmatprep.subr.mxu0 0.0
    %v1344 = vand.u32 %v105, 4294901760
    %v1345 = vsub.f32 %v105, %v1344
    %v1346 = vand.u32 %v1345, 4294901760
    %v1347 = vsub.f32 %v1345, %v1346
    %v1348 = vand.u32 %v1347, 4294901760
    %1349 = vmatpush2.msra.mxu0 %v1348
    %1350 = vmatprep.subr.mxu0 0.0
    %v1351 = vand.u32 %v104, 4294901760
    %v1352 = vsub.f32 %v104, %v1351
    %v1353 = vand.u32 %v1352, 4294901760
    %v1354 = vsub.f32 %v1352, %v1353
    %v1355 = vand.u32 %v1354, 4294901760
    %1356 = vmatpush2.msra.mxu0 %v1355
    %1357 = vmatprep.subr.mxu0 0.0
    %v1358 = vand.u32 %v103, 4294901760
    %v1359 = vsub.f32 %v103, %v1358
    %v1360 = vand.u32 %v1359, 4294901760
    %v1361 = vsub.f32 %v1359, %v1360
    %v1362 = vand.u32 %v1361, 4294901760
    %1363 = vmatpush2.msra.mxu0 %v1362
    %1364 = vmatprep.subr.mxu0 0.0
    %v1365 = vand.u32 %v102, 4294901760
    %v1366 = vsub.f32 %v102, %v1365
    %v1367 = vand.u32 %v1366, 4294901760
    %v1368 = vsub.f32 %v1366, %v1367
    %v1369 = vand.u32 %v1368, 4294901760
    %1370 = vmatpush2.msra.mxu0 %v1369
    %1371 = vmatprep.subr.mxu0 0.0
    %v1372 = vand.u32 %v101, 4294901760
    %v1373 = vsub.f32 %v101, %v1372
    %v1374 = vand.u32 %v1373, 4294901760
    %v1375 = vsub.f32 %v1373, %v1374
    %v1376 = vand.u32 %v1375, 4294901760
    %1377 = vmatpush2.msra.mxu0 %v1376
    %1378 = vmatprep.subr.mxu0 0.0
    %v1379 = vand.u32 %v100, 4294901760
    %v1380 = vsub.f32 %v100, %v1379
    %v1381 = vand.u32 %v1380, 4294901760
    %v1382 = vsub.f32 %v1380, %v1381
    %v1383 = vand.u32 %v1382, 4294901760
    %1384 = vmatpush2.msra.mxu0 %v1383
    %v1385 = vand.u32 %v47, 4294901760
    %1386 = vmatprep.mubr.f32.mxu0 %v1385
    %v1387 = vand.u32 %v46, 4294901760
    %1388 = vmatmul.mubr.f32.gmra.mxu0 %v1387
    %v1389 = vpop.f32.mrf.mxu0
    %v1390 = vadd.f32 %v1143, %v1389
    %v1391 = vpop.f32.mrf.mxu0
    %v1392 = vand.u32 %v51, 4294901760
    %1393 = vmatprep.mubr.f32.mxu0 %v1392
    %v1394 = vand.u32 %v50, 4294901760
    %1395 = vmatmul.mubr.f32.gmra.mxu0 %v1394
    %v1396 = vpop.f32.mrf.mxu0
    %v1397 = vadd.f32 %v1158, %v1396
    %v1398 = vpop.f32.mrf.mxu0
    %1399 = vdwg.mxu0
    %1400 = vmatprep.subr.mxu0 0.0
    %v1401 = vand.u32 %v99, 4294901760
    %v1402 = vsub.f32 %v99, %v1401
    %1403 = vmatpush1.msra.mxu0 %v1402
    %1404 = vmatprep.subr.mxu0 0.0
    %v1405 = vand.u32 %v98, 4294901760
    %v1406 = vsub.f32 %v98, %v1405
    %1407 = vmatpush1.msra.mxu0 %v1406
    %1408 = vmatprep.subr.mxu0 0.0
    %v1409 = vand.u32 %v97, 4294901760
    %v1410 = vsub.f32 %v97, %v1409
    %1411 = vmatpush1.msra.mxu0 %v1410
    %1412 = vmatprep.subr.mxu0 0.0
    %v1413 = vand.u32 %v96, 4294901760
    %v1414 = vsub.f32 %v96, %v1413
    %1415 = vmatpush1.msra.mxu0 %v1414
    %1416 = vmatprep.subr.mxu0 0.0
    %v1417 = vand.u32 %v95, 4294901760
    %v1418 = vsub.f32 %v95, %v1417
    %1419 = vmatpush1.msra.mxu0 %v1418
    %1420 = vmatprep.subr.mxu0 0.0
    %v1421 = vand.u32 %v94, 4294901760
    %v1422 = vsub.f32 %v94, %v1421
    %1423 = vmatpush1.msra.mxu0 %v1422
    %1424 = vmatprep.subr.mxu0 0.0
    %v1425 = vand.u32 %v93, 4294901760
    %v1426 = vsub.f32 %v93, %v1425
    %1427 = vmatpush1.msra.mxu0 %v1426
    %1428 = vmatprep.subr.mxu0 0.0
    %v1429 = vand.u32 %v92, 4294901760
    %v1430 = vsub.f32 %v92, %v1429
    %1431 = vmatpush1.msra.mxu0 %v1430
    %1432 = vmatprep.subr.mxu0 0.0
    %v1433 = vand.u32 %v91, 4294901760
    %v1434 = vsub.f32 %v91, %v1433
    %1435 = vmatpush1.msra.mxu0 %v1434
    %1436 = vmatprep.subr.mxu0 0.0
    %v1437 = vand.u32 %v90, 4294901760
    %v1438 = vsub.f32 %v90, %v1437
    %1439 = vmatpush1.msra.mxu0 %v1438
    %1440 = vmatprep.subr.mxu0 0.0
    %v1441 = vand.u32 %v89, 4294901760
    %v1442 = vsub.f32 %v89, %v1441
    %1443 = vmatpush1.msra.mxu0 %v1442
    %1444 = vmatprep.subr.mxu0 0.0
    %v1445 = vand.u32 %v88, 4294901760
    %v1446 = vsub.f32 %v88, %v1445
    %1447 = vmatpush1.msra.mxu0 %v1446
    %1448 = vmatprep.subr.mxu0 0.0
    %v1449 = vand.u32 %v87, 4294901760
    %v1450 = vsub.f32 %v87, %v1449
    %1451 = vmatpush1.msra.mxu0 %v1450
    %1452 = vmatprep.subr.mxu0 0.0
    %v1453 = vand.u32 %v86, 4294901760
    %v1454 = vsub.f32 %v86, %v1453
    %1455 = vmatpush1.msra.mxu0 %v1454
    %1456 = vmatprep.subr.mxu0 0.0
    %v1457 = vand.u32 %v85, 4294901760
    %v1458 = vsub.f32 %v85, %v1457
    %1459 = vmatpush1.msra.mxu0 %v1458
    %1460 = vmatprep.subr.mxu0 0.0
    %v1461 = vand.u32 %v84, 4294901760
    %v1462 = vsub.f32 %v84, %v1461
    %1463 = vmatpush1.msra.mxu0 %v1462
    %1464 = vmatprep.subr.mxu0 0.0
    %v1465 = vand.u32 %v115, 4294901760
    %v1466 = vsub.f32 %v115, %v1465
    %1467 = vmatpush2.msra.mxu0 %v1466
    %1468 = vmatprep.subr.mxu0 0.0
    %v1469 = vand.u32 %v114, 4294901760
    %v1470 = vsub.f32 %v114, %v1469
    %1471 = vmatpush2.msra.mxu0 %v1470
    %1472 = vmatprep.subr.mxu0 0.0
    %v1473 = vand.u32 %v113, 4294901760
    %v1474 = vsub.f32 %v113, %v1473
    %1475 = vmatpush2.msra.mxu0 %v1474
    %1476 = vmatprep.subr.mxu0 0.0
    %v1477 = vand.u32 %v112, 4294901760
    %v1478 = vsub.f32 %v112, %v1477
    %1479 = vmatpush2.msra.mxu0 %v1478
    %1480 = vmatprep.subr.mxu0 0.0
    %v1481 = vand.u32 %v111, 4294901760
    %v1482 = vsub.f32 %v111, %v1481
    %1483 = vmatpush2.msra.mxu0 %v1482
    %1484 = vmatprep.subr.mxu0 0.0
    %v1485 = vand.u32 %v110, 4294901760
    %v1486 = vsub.f32 %v110, %v1485
    %1487 = vmatpush2.msra.mxu0 %v1486
    %1488 = vmatprep.subr.mxu0 0.0
    %v1489 = vand.u32 %v109, 4294901760
    %v1490 = vsub.f32 %v109, %v1489
    %1491 = vmatpush2.msra.mxu0 %v1490
    %1492 = vmatprep.subr.mxu0 0.0
    %v1493 = vand.u32 %v108, 4294901760
    %v1494 = vsub.f32 %v108, %v1493
    %1495 = vmatpush2.msra.mxu0 %v1494
    %1496 = vmatprep.subr.mxu0 0.0
    %v1497 = vand.u32 %v107, 4294901760
    %v1498 = vsub.f32 %v107, %v1497
    %1499 = vmatpush2.msra.mxu0 %v1498
    %1500 = vmatprep.subr.mxu0 0.0
    %v1501 = vand.u32 %v106, 4294901760
    %v1502 = vsub.f32 %v106, %v1501
    %1503 = vmatpush2.msra.mxu0 %v1502
    %1504 = vmatprep.subr.mxu0 0.0
    %v1505 = vand.u32 %v105, 4294901760
    %v1506 = vsub.f32 %v105, %v1505
    %1507 = vmatpush2.msra.mxu0 %v1506
    %1508 = vmatprep.subr.mxu0 0.0
    %v1509 = vand.u32 %v104, 4294901760
    %v1510 = vsub.f32 %v104, %v1509
    %1511 = vmatpush2.msra.mxu0 %v1510
    %1512 = vmatprep.subr.mxu0 0.0
    %v1513 = vand.u32 %v103, 4294901760
    %v1514 = vsub.f32 %v103, %v1513
    %1515 = vmatpush2.msra.mxu0 %v1514
    %1516 = vmatprep.subr.mxu0 0.0
    %v1517 = vand.u32 %v102, 4294901760
    %v1518 = vsub.f32 %v102, %v1517
    %1519 = vmatpush2.msra.mxu0 %v1518
    %1520 = vmatprep.subr.mxu0 0.0
    %v1521 = vand.u32 %v101, 4294901760
    %v1522 = vsub.f32 %v101, %v1521
    %1523 = vmatpush2.msra.mxu0 %v1522
    %1524 = vmatprep.subr.mxu0 0.0
    %v1525 = vand.u32 %v100, 4294901760
    %v1526 = vsub.f32 %v100, %v1525
    %1527 = vmatpush2.msra.mxu0 %v1526
    %v1528 = vand.u32 %v47, 4294901760
    %v1529 = vsub.f32 %v47, %v1528
    %1530 = vmatprep.mubr.f32.mxu0 %v1529
    %v1531 = vand.u32 %v46, 4294901760
    %v1532 = vsub.f32 %v46, %v1531
    %1533 = vmatmul.mubr.f32.gmra.mxu0 %v1532
    %v1534 = vpop.f32.mrf.mxu0
    %v1535 = vadd.f32 %v1390, %v1534
    %v1536 = vpop.f32.mrf.mxu0
    %v1537 = vand.u32 %v51, 4294901760
    %v1538 = vsub.f32 %v51, %v1537
    %1539 = vmatprep.mubr.f32.mxu0 %v1538
    %v1540 = vand.u32 %v50, 4294901760
    %v1541 = vsub.f32 %v50, %v1540
    %1542 = vmatmul.mubr.f32.gmra.mxu0 %v1541
    %v1543 = vpop.f32.mrf.mxu0
    %v1544 = vadd.f32 %v1397, %v1543
    %v1545 = vpop.f32.mrf.mxu0
    %1546 = vdwg.mxu0
    %1547 = vmatprep.subr.mxu0 0.0
    %v1548 = vand.u32 %v99, 4294901760
    %1549 = vmatpush1.msra.mxu0 %v1548
    %1550 = vmatprep.subr.mxu0 0.0
    %v1551 = vand.u32 %v98, 4294901760
    %1552 = vmatpush1.msra.mxu0 %v1551
    %1553 = vmatprep.subr.mxu0 0.0
    %v1554 = vand.u32 %v97, 4294901760
    %1555 = vmatpush1.msra.mxu0 %v1554
    %1556 = vmatprep.subr.mxu0 0.0
    %v1557 = vand.u32 %v96, 4294901760
    %1558 = vmatpush1.msra.mxu0 %v1557
    %1559 = vmatprep.subr.mxu0 0.0
    %v1560 = vand.u32 %v95, 4294901760
    %1561 = vmatpush1.msra.mxu0 %v1560
    %1562 = vmatprep.subr.mxu0 0.0
    %v1563 = vand.u32 %v94, 4294901760
    %1564 = vmatpush1.msra.mxu0 %v1563
    %1565 = vmatprep.subr.mxu0 0.0
    %v1566 = vand.u32 %v93, 4294901760
    %1567 = vmatpush1.msra.mxu0 %v1566
    %1568 = vmatprep.subr.mxu0 0.0
    %v1569 = vand.u32 %v92, 4294901760
    %1570 = vmatpush1.msra.mxu0 %v1569
    %1571 = vmatprep.subr.mxu0 0.0
    %v1572 = vand.u32 %v91, 4294901760
    %1573 = vmatpush1.msra.mxu0 %v1572
    %1574 = vmatprep.subr.mxu0 0.0
    %v1575 = vand.u32 %v90, 4294901760
    %1576 = vmatpush1.msra.mxu0 %v1575
    %1577 = vmatprep.subr.mxu0 0.0
    %v1578 = vand.u32 %v89, 4294901760
    %1579 = vmatpush1.msra.mxu0 %v1578
    %1580 = vmatprep.subr.mxu0 0.0
    %v1581 = vand.u32 %v88, 4294901760
    %1582 = vmatpush1.msra.mxu0 %v1581
    %1583 = vmatprep.subr.mxu0 0.0
    %v1584 = vand.u32 %v87, 4294901760
    %1585 = vmatpush1.msra.mxu0 %v1584
    %1586 = vmatprep.subr.mxu0 0.0
    %v1587 = vand.u32 %v86, 4294901760
    %1588 = vmatpush1.msra.mxu0 %v1587
    %1589 = vmatprep.subr.mxu0 0.0
    %v1590 = vand.u32 %v85, 4294901760
    %1591 = vmatpush1.msra.mxu0 %v1590
    %1592 = vmatprep.subr.mxu0 0.0
    %v1593 = vand.u32 %v84, 4294901760
    %1594 = vmatpush1.msra.mxu0 %v1593
    %1595 = vmatprep.subr.mxu0 0.0
    %v1596 = vand.u32 %v115, 4294901760
    %1597 = vmatpush2.msra.mxu0 %v1596
    %1598 = vmatprep.subr.mxu0 0.0
    %v1599 = vand.u32 %v114, 4294901760
    %1600 = vmatpush2.msra.mxu0 %v1599
    %1601 = vmatprep.subr.mxu0 0.0
    %v1602 = vand.u32 %v113, 4294901760
    %1603 = vmatpush2.msra.mxu0 %v1602
    %1604 = vmatprep.subr.mxu0 0.0
    %v1605 = vand.u32 %v112, 4294901760
    %1606 = vmatpush2.msra.mxu0 %v1605
    %1607 = vmatprep.subr.mxu0 0.0
    %v1608 = vand.u32 %v111, 4294901760
    %1609 = vmatpush2.msra.mxu0 %v1608
    %1610 = vmatprep.subr.mxu0 0.0
    %v1611 = vand.u32 %v110, 4294901760
    %1612 = vmatpush2.msra.mxu0 %v1611
    %1613 = vmatprep.subr.mxu0 0.0
    %v1614 = vand.u32 %v109, 4294901760
    %1615 = vmatpush2.msra.mxu0 %v1614
    %1616 = vmatprep.subr.mxu0 0.0
    %v1617 = vand.u32 %v108, 4294901760
    %1618 = vmatpush2.msra.mxu0 %v1617
    %1619 = vmatprep.subr.mxu0 0.0
    %v1620 = vand.u32 %v107, 4294901760
    %1621 = vmatpush2.msra.mxu0 %v1620
    %1622 = vmatprep.subr.mxu0 0.0
    %v1623 = vand.u32 %v106, 4294901760
    %1624 = vmatpush2.msra.mxu0 %v1623
    %1625 = vmatprep.subr.mxu0 0.0
    %v1626 = vand.u32 %v105, 4294901760
    %1627 = vmatpush2.msra.mxu0 %v1626
    %1628 = vmatprep.subr.mxu0 0.0
    %v1629 = vand.u32 %v104, 4294901760
    %1630 = vmatpush2.msra.mxu0 %v1629
    %1631 = vmatprep.subr.mxu0 0.0
    %v1632 = vand.u32 %v103, 4294901760
    %1633 = vmatpush2.msra.mxu0 %v1632
    %1634 = vmatprep.subr.mxu0 0.0
    %v1635 = vand.u32 %v102, 4294901760
    %1636 = vmatpush2.msra.mxu0 %v1635
    %1637 = vmatprep.subr.mxu0 0.0
    %v1638 = vand.u32 %v101, 4294901760
    %1639 = vmatpush2.msra.mxu0 %v1638
    %1640 = vmatprep.subr.mxu0 0.0
    %v1641 = vand.u32 %v100, 4294901760
    %1642 = vmatpush2.msra.mxu0 %v1641
    %v1643 = vand.u32 %v47, 4294901760
    %v1644 = vsub.f32 %v47, %v1643
    %v1645 = vand.u32 %v1644, 4294901760
    %1646 = vmatprep.mubr.f32.mxu0 %v1645
    %v1647 = vand.u32 %v46, 4294901760
    %v1648 = vsub.f32 %v46, %v1647
    %v1649 = vand.u32 %v1648, 4294901760
    %1650 = vmatmul.mubr.f32.gmra.mxu0 %v1649
    %v1651 = vpop.f32.mrf.mxu0
    %v1652 = vadd.f32 %v1535, %v1651
    %v1653 = vpop.f32.mrf.mxu0
    %v1654 = vand.u32 %v51, 4294901760
    %v1655 = vsub.f32 %v51, %v1654
    %v1656 = vand.u32 %v1655, 4294901760
    %1657 = vmatprep.mubr.f32.mxu0 %v1656
    %v1658 = vand.u32 %v50, 4294901760
    %v1659 = vsub.f32 %v50, %v1658
    %v1660 = vand.u32 %v1659, 4294901760
    %1661 = vmatmul.mubr.f32.gmra.mxu0 %v1660
    %v1662 = vpop.f32.mrf.mxu0
    %v1663 = vadd.f32 %v1544, %v1662
    %v1664 = vpop.f32.mrf.mxu0
    %1665 = vdwg.mxu0
    %1666 = vmatprep.subr.mxu0 0.0
    %v1667 = vand.u32 %v99, 4294901760
    %v1668 = vsub.f32 %v99, %v1667
    %v1669 = vand.u32 %v1668, 4294901760
    %1670 = vmatpush1.msra.mxu0 %v1669
    %1671 = vmatprep.subr.mxu0 0.0
    %v1672 = vand.u32 %v98, 4294901760
    %v1673 = vsub.f32 %v98, %v1672
    %v1674 = vand.u32 %v1673, 4294901760
    %1675 = vmatpush1.msra.mxu0 %v1674
    %1676 = vmatprep.subr.mxu0 0.0
    %v1677 = vand.u32 %v97, 4294901760
    %v1678 = vsub.f32 %v97, %v1677
    %v1679 = vand.u32 %v1678, 4294901760
    %1680 = vmatpush1.msra.mxu0 %v1679
    %1681 = vmatprep.subr.mxu0 0.0
    %v1682 = vand.u32 %v96, 4294901760
    %v1683 = vsub.f32 %v96, %v1682
    %v1684 = vand.u32 %v1683, 4294901760
    %1685 = vmatpush1.msra.mxu0 %v1684
    %1686 = vmatprep.subr.mxu0 0.0
    %v1687 = vand.u32 %v95, 4294901760
    %v1688 = vsub.f32 %v95, %v1687
    %v1689 = vand.u32 %v1688, 4294901760
    %1690 = vmatpush1.msra.mxu0 %v1689
    %1691 = vmatprep.subr.mxu0 0.0
    %v1692 = vand.u32 %v94, 4294901760
    %v1693 = vsub.f32 %v94, %v1692
    %v1694 = vand.u32 %v1693, 4294901760
    %1695 = vmatpush1.msra.mxu0 %v1694
    %1696 = vmatprep.subr.mxu0 0.0
    %v1697 = vand.u32 %v93, 4294901760
    %v1698 = vsub.f32 %v93, %v1697
    %v1699 = vand.u32 %v1698, 4294901760
    %1700 = vmatpush1.msra.mxu0 %v1699
    %1701 = vmatprep.subr.mxu0 0.0
    %v1702 = vand.u32 %v92, 4294901760
    %v1703 = vsub.f32 %v92, %v1702
    %v1704 = vand.u32 %v1703, 4294901760
    %1705 = vmatpush1.msra.mxu0 %v1704
    %1706 = vmatprep.subr.mxu0 0.0
    %v1707 = vand.u32 %v91, 4294901760
    %v1708 = vsub.f32 %v91, %v1707
    %v1709 = vand.u32 %v1708, 4294901760
    %1710 = vmatpush1.msra.mxu0 %v1709
    %1711 = vmatprep.subr.mxu0 0.0
    %v1712 = vand.u32 %v90, 4294901760
    %v1713 = vsub.f32 %v90, %v1712
    %v1714 = vand.u32 %v1713, 4294901760
    %1715 = vmatpush1.msra.mxu0 %v1714
    %1716 = vmatprep.subr.mxu0 0.0
    %v1717 = vand.u32 %v89, 4294901760
    %v1718 = vsub.f32 %v89, %v1717
    %v1719 = vand.u32 %v1718, 4294901760
    %1720 = vmatpush1.msra.mxu0 %v1719
    %1721 = vmatprep.subr.mxu0 0.0
    %v1722 = vand.u32 %v88, 4294901760
    %v1723 = vsub.f32 %v88, %v1722
    %v1724 = vand.u32 %v1723, 4294901760
    %1725 = vmatpush1.msra.mxu0 %v1724
    %1726 = vmatprep.subr.mxu0 0.0
    %v1727 = vand.u32 %v87, 4294901760
    %v1728 = vsub.f32 %v87, %v1727
    %v1729 = vand.u32 %v1728, 4294901760
    %1730 = vmatpush1.msra.mxu0 %v1729
    %1731 = vmatprep.subr.mxu0 0.0
    %v1732 = vand.u32 %v86, 4294901760
    %v1733 = vsub.f32 %v86, %v1732
    %v1734 = vand.u32 %v1733, 4294901760
    %1735 = vmatpush1.msra.mxu0 %v1734
    %1736 = vmatprep.subr.mxu0 0.0
    %v1737 = vand.u32 %v85, 4294901760
    %v1738 = vsub.f32 %v85, %v1737
    %v1739 = vand.u32 %v1738, 4294901760
    %1740 = vmatpush1.msra.mxu0 %v1739
    %1741 = vmatprep.subr.mxu0 0.0
    %v1742 = vand.u32 %v84, 4294901760
    %v1743 = vsub.f32 %v84, %v1742
    %v1744 = vand.u32 %v1743, 4294901760
    %1745 = vmatpush1.msra.mxu0 %v1744
    %1746 = vmatprep.subr.mxu0 0.0
    %v1747 = vand.u32 %v115, 4294901760
    %v1748 = vsub.f32 %v115, %v1747
    %v1749 = vand.u32 %v1748, 4294901760
    %1750 = vmatpush2.msra.mxu0 %v1749
    %1751 = vmatprep.subr.mxu0 0.0
    %v1752 = vand.u32 %v114, 4294901760
    %v1753 = vsub.f32 %v114, %v1752
    %v1754 = vand.u32 %v1753, 4294901760
    %1755 = vmatpush2.msra.mxu0 %v1754
    %1756 = vmatprep.subr.mxu0 0.0
    %v1757 = vand.u32 %v113, 4294901760
    %v1758 = vsub.f32 %v113, %v1757
    %v1759 = vand.u32 %v1758, 4294901760
    %1760 = vmatpush2.msra.mxu0 %v1759
    %1761 = vmatprep.subr.mxu0 0.0
    %v1762 = vand.u32 %v112, 4294901760
    %v1763 = vsub.f32 %v112, %v1762
    %v1764 = vand.u32 %v1763, 4294901760
    %1765 = vmatpush2.msra.mxu0 %v1764
    %1766 = vmatprep.subr.mxu0 0.0
    %v1767 = vand.u32 %v111, 4294901760
    %v1768 = vsub.f32 %v111, %v1767
    %v1769 = vand.u32 %v1768, 4294901760
    %1770 = vmatpush2.msra.mxu0 %v1769
    %1771 = vmatprep.subr.mxu0 0.0
    %v1772 = vand.u32 %v110, 4294901760
    %v1773 = vsub.f32 %v110, %v1772
    %v1774 = vand.u32 %v1773, 4294901760
    %1775 = vmatpush2.msra.mxu0 %v1774
    %1776 = vmatprep.subr.mxu0 0.0
    %v1777 = vand.u32 %v109, 4294901760
    %v1778 = vsub.f32 %v109, %v1777
    %v1779 = vand.u32 %v1778, 4294901760
    %1780 = vmatpush2.msra.mxu0 %v1779
    %1781 = vmatprep.subr.mxu0 0.0
    %v1782 = vand.u32 %v108, 4294901760
    %v1783 = vsub.f32 %v108, %v1782
    %v1784 = vand.u32 %v1783, 4294901760
    %1785 = vmatpush2.msra.mxu0 %v1784
    %1786 = vmatprep.subr.mxu0 0.0
    %v1787 = vand.u32 %v107, 4294901760
    %v1788 = vsub.f32 %v107, %v1787
    %v1789 = vand.u32 %v1788, 4294901760
    %1790 = vmatpush2.msra.mxu0 %v1789
    %1791 = vmatprep.subr.mxu0 0.0
    %v1792 = vand.u32 %v106, 4294901760
    %v1793 = vsub.f32 %v106, %v1792
    %v1794 = vand.u32 %v1793, 4294901760
    %1795 = vmatpush2.msra.mxu0 %v1794
    %1796 = vmatprep.subr.mxu0 0.0
    %v1797 = vand.u32 %v105, 4294901760
    %v1798 = vsub.f32 %v105, %v1797
    %v1799 = vand.u32 %v1798, 4294901760
    %1800 = vmatpush2.msra.mxu0 %v1799
    %1801 = vmatprep.subr.mxu0 0.0
    %v1802 = vand.u32 %v104, 4294901760
    %v1803 = vsub.f32 %v104, %v1802
    %v1804 = vand.u32 %v1803, 4294901760
    %1805 = vmatpush2.msra.mxu0 %v1804
    %1806 = vmatprep.subr.mxu0 0.0
    %v1807 = vand.u32 %v103, 4294901760
    %v1808 = vsub.f32 %v103, %v1807
    %v1809 = vand.u32 %v1808, 4294901760
    %1810 = vmatpush2.msra.mxu0 %v1809
    %1811 = vmatprep.subr.mxu0 0.0
    %v1812 = vand.u32 %v102, 4294901760
    %v1813 = vsub.f32 %v102, %v1812
    %v1814 = vand.u32 %v1813, 4294901760
    %1815 = vmatpush2.msra.mxu0 %v1814
    %1816 = vmatprep.subr.mxu0 0.0
    %v1817 = vand.u32 %v101, 4294901760
    %v1818 = vsub.f32 %v101, %v1817
    %v1819 = vand.u32 %v1818, 4294901760
    %1820 = vmatpush2.msra.mxu0 %v1819
    %1821 = vmatprep.subr.mxu0 0.0
    %v1822 = vand.u32 %v100, 4294901760
    %v1823 = vsub.f32 %v100, %v1822
    %v1824 = vand.u32 %v1823, 4294901760
    %1825 = vmatpush2.msra.mxu0 %v1824
    %v1826 = vand.u32 %v47, 4294901760
    %1827 = vmatprep.mubr.f32.mxu0 %v1826
    %v1828 = vand.u32 %v46, 4294901760
    %1829 = vmatmul.mubr.f32.gmra.mxu0 %v1828
    %v1830 = vpop.f32.mrf.mxu0
    %v1831 = vadd.f32 %v1652, %v1830
    %v1832 = vpop.f32.mrf.mxu0
    %v1833 = vand.u32 %v51, 4294901760
    %1834 = vmatprep.mubr.f32.mxu0 %v1833
    %v1835 = vand.u32 %v50, 4294901760
    %1836 = vmatmul.mubr.f32.gmra.mxu0 %v1835
    %v1837 = vpop.f32.mrf.mxu0
    %v1838 = vadd.f32 %v1663, %v1837
    %v1839 = vpop.f32.mrf.mxu0
    %1840 = vdwg.mxu0
    %1841 = vmatprep.subr.mxu0 0.0
    %v1842 = vand.u32 %v99, 4294901760
    %1843 = vmatpush1.msra.mxu0 %v1842
    %1844 = vmatprep.subr.mxu0 0.0
    %v1845 = vand.u32 %v98, 4294901760
    %1846 = vmatpush1.msra.mxu0 %v1845
    %1847 = vmatprep.subr.mxu0 0.0
    %v1848 = vand.u32 %v97, 4294901760
    %1849 = vmatpush1.msra.mxu0 %v1848
    %1850 = vmatprep.subr.mxu0 0.0
    %v1851 = vand.u32 %v96, 4294901760
    %1852 = vmatpush1.msra.mxu0 %v1851
    %1853 = vmatprep.subr.mxu0 0.0
    %v1854 = vand.u32 %v95, 4294901760
    %1855 = vmatpush1.msra.mxu0 %v1854
    %1856 = vmatprep.subr.mxu0 0.0
    %v1857 = vand.u32 %v94, 4294901760
    %1858 = vmatpush1.msra.mxu0 %v1857
    %1859 = vmatprep.subr.mxu0 0.0
    %v1860 = vand.u32 %v93, 4294901760
    %1861 = vmatpush1.msra.mxu0 %v1860
    %1862 = vmatprep.subr.mxu0 0.0
    %v1863 = vand.u32 %v92, 4294901760
    %1864 = vmatpush1.msra.mxu0 %v1863
    %1865 = vmatprep.subr.mxu0 0.0
    %v1866 = vand.u32 %v91, 4294901760
    %1867 = vmatpush1.msra.mxu0 %v1866
    %1868 = vmatprep.subr.mxu0 0.0
    %v1869 = vand.u32 %v90, 4294901760
    %1870 = vmatpush1.msra.mxu0 %v1869
    %1871 = vmatprep.subr.mxu0 0.0
    %v1872 = vand.u32 %v89, 4294901760
    %1873 = vmatpush1.msra.mxu0 %v1872
    %1874 = vmatprep.subr.mxu0 0.0
    %v1875 = vand.u32 %v88, 4294901760
    %1876 = vmatpush1.msra.mxu0 %v1875
    %1877 = vmatprep.subr.mxu0 0.0
    %v1878 = vand.u32 %v87, 4294901760
    %1879 = vmatpush1.msra.mxu0 %v1878
    %1880 = vmatprep.subr.mxu0 0.0
    %v1881 = vand.u32 %v86, 4294901760
    %1882 = vmatpush1.msra.mxu0 %v1881
    %1883 = vmatprep.subr.mxu0 0.0
    %v1884 = vand.u32 %v85, 4294901760
    %1885 = vmatpush1.msra.mxu0 %v1884
    %1886 = vmatprep.subr.mxu0 0.0
    %v1887 = vand.u32 %v84, 4294901760
    %1888 = vmatpush1.msra.mxu0 %v1887
    %1889 = vmatprep.subr.mxu0 0.0
    %v1890 = vand.u32 %v115, 4294901760
    %1891 = vmatpush2.msra.mxu0 %v1890
    %1892 = vmatprep.subr.mxu0 0.0
    %v1893 = vand.u32 %v114, 4294901760
    %1894 = vmatpush2.msra.mxu0 %v1893
    %1895 = vmatprep.subr.mxu0 0.0
    %v1896 = vand.u32 %v113, 4294901760
    %1897 = vmatpush2.msra.mxu0 %v1896
    %1898 = vmatprep.subr.mxu0 0.0
    %v1899 = vand.u32 %v112, 4294901760
    %1900 = vmatpush2.msra.mxu0 %v1899
    %1901 = vmatprep.subr.mxu0 0.0
    %v1902 = vand.u32 %v111, 4294901760
    %1903 = vmatpush2.msra.mxu0 %v1902
    %1904 = vmatprep.subr.mxu0 0.0
    %v1905 = vand.u32 %v110, 4294901760
    %1906 = vmatpush2.msra.mxu0 %v1905
    %1907 = vmatprep.subr.mxu0 0.0
    %v1908 = vand.u32 %v109, 4294901760
    %1909 = vmatpush2.msra.mxu0 %v1908
    %1910 = vmatprep.subr.mxu0 0.0
    %v1911 = vand.u32 %v108, 4294901760
    %1912 = vmatpush2.msra.mxu0 %v1911
    %1913 = vmatprep.subr.mxu0 0.0
    %v1914 = vand.u32 %v107, 4294901760
    %1915 = vmatpush2.msra.mxu0 %v1914
    %1916 = vmatprep.subr.mxu0 0.0
    %v1917 = vand.u32 %v106, 4294901760
    %1918 = vmatpush2.msra.mxu0 %v1917
    %1919 = vmatprep.subr.mxu0 0.0
    %v1920 = vand.u32 %v105, 4294901760
    %1921 = vmatpush2.msra.mxu0 %v1920
    %1922 = vmatprep.subr.mxu0 0.0
    %v1923 = vand.u32 %v104, 4294901760
    %1924 = vmatpush2.msra.mxu0 %v1923
    %1925 = vmatprep.subr.mxu0 0.0
    %v1926 = vand.u32 %v103, 4294901760
    %1927 = vmatpush2.msra.mxu0 %v1926
    %1928 = vmatprep.subr.mxu0 0.0
    %v1929 = vand.u32 %v102, 4294901760
    %1930 = vmatpush2.msra.mxu0 %v1929
    %1931 = vmatprep.subr.mxu0 0.0
    %v1932 = vand.u32 %v101, 4294901760
    %1933 = vmatpush2.msra.mxu0 %v1932
    %1934 = vmatprep.subr.mxu0 0.0
    %v1935 = vand.u32 %v100, 4294901760
    %1936 = vmatpush2.msra.mxu0 %v1935
    %v1937 = vand.u32 %v47, 4294901760
    %1938 = vmatprep.mubr.f32.mxu0 %v1937
    %v1939 = vand.u32 %v46, 4294901760
    %1940 = vmatmul.mubr.f32.gmra.mxu0 %v1939
    %v1941 = vpop.f32.mrf.mxu0
    %v1942 = vadd.f32 %v1831, %v1941
    %v1943 = vpop.f32.mrf.mxu0
    %v1944 = vand.u32 %v51, 4294901760
    %1945 = vmatprep.mubr.f32.mxu0 %v1944
    %v1946 = vand.u32 %v50, 4294901760
    %1947 = vmatmul.mubr.f32.gmra.mxu0 %v1946
    %v1948 = vpop.f32.mrf.mxu0
    %v1949 = vadd.f32 %v1838, %v1948
    %v1950 = vpop.f32.mrf.mxu0
    %1951 = vdwg.mxu0
    %v1952 = vld [vmem:[%s0] sm:$0xff]
    %v1953 = vld [vmem:[%s0 + $0x8] sm:$0xff]
    %v1954 = vadd.f32 %v1952, %v1942
    %v1955 = vadd.f32 %v1953, %v1949
    %1956 = vst [vmem:[#allocation2] sm:$0xff] %v1954
    %1957 = vst [vmem:[#allocation2 + $0x8] sm:$0xff] %v1955
    // Predicated region
    $region14: #{learned_position_encoding.1} parent=1 // pred_check
      _
    $region15: #{learned_position_encoding.1} parent=1 // pred_check_branch
      %1959 = sbr.rel (0) target = $region17
    $region16: #{learned_position_encoding.1} parent=1 // pred_region
      %s1961 = ssub.s32 256, 256
      %1962 = vsyncadd [#allocation3], %s1961
      %s1963 = sshll.u32 [#allocation2], 4
      %s1964 = int_to_ptr.vmem [resolvable:$true] %s1963
      %1969 = dma.vmem_to_hbm [thread:$0]  %s1964, 256, %s3, [#allocation3], 128, 128, 8
    $region17: #{learned_position_encoding.1} parent=1 // pred_fallthru
      _
    // Predicated region
    $region18: #{learned_position_encoding.1} parent=1 // pred_check
      _
    $region19: #{learned_position_encoding.1} parent=1 // pred_check_branch
      %1971 = sbr.rel (0) target = $region21
    $region20: #{learned_position_encoding.1} parent=1 // pred_region
      %1972 = dma.done [#allocation3], 256
    $region21: #{learned_position_encoding.1} parent=1 // pred_fallthru
      _
    %1973 = vsyncpa [#allocation3], 1

</llo_original>
